<compile_context>
chip_gen: v7x
topology: tpu7x:2x2x1
jax: 0.10.0
libtpu: 0.0.40
codegen_flags: <defaults>
</compile_context>

<pallas_src>
import jax
import jax.numpy as jnp
from jax import lax
from jax.experimental import pallas as pl
from jax.experimental.pallas import tpu as pltpu

INPUT_SIZE = 1
HIDDEN_SIZE = 50
NUM_LAYERS = 2

HB = 64                  # padded hidden width per layer / per gate block (lanes)
STATE = 2 * HB           # fused [layer0 | layer1] state width = 128 (one vreg)
NG = 8 * HB              # fused gate width = 512; 64-lane column blocks ordered
                         #   [i0 i1 f0 f1 o0 o1 g0 g1]
SIGW = 6 * HB            # contiguous sigmoid slab (i0 i1 f0 f1 o0 o1)
GATE_PERM = (0, 1, 3, 2)  # PyTorch gate order (i, f, g, o) -> kernel (i, f, o, g)


# ----------------------------- Pallas kernel --------------------------------

def lstm_kernel(x_ref, w_big_ref, wih0_ref, bias_ref, wfc_ref, bfc_ref, out_ref):
    """Skewed 2-layer LSTM over all timesteps + final Linear, fully unrolled."""
    B = x_ref.shape[0]
    T = x_ref.shape[1]

    w_big = w_big_ref[...]                         # (STATE, NG) = (128, 512)
    wih0 = wih0_ref[...]                           # (1, NG) layer-0 input weights
    # Hoist the bias broadcast out of the unrolled recurrence (JAX does not CSE
    # broadcast_in_dim).
    bias_b = jnp.broadcast_to(bias_ref[...], (B, NG))

    lane = lax.broadcasted_iota(jnp.int32, (B, STATE), 1)
    layer0_mask = lane < HB                        # lanes [0, HB): layer-0 state

    h = jnp.zeros((B, STATE), jnp.float32)         # [h0(s) | h1(s-1)]
    c = jnp.zeros((B, STATE), jnp.float32)

    # Skewed two-layer recurrence, fully unrolled (T static & tiny): stage s
    # runs layer-0 step s and layer-1 step s-1 with ONE shared-LHS matmul.
    for s in range(T + 1):
        rec = (jnp.dot(h, w_big, preferred_element_type=jnp.float32)
               if s > 0 else 0.0)
        # Layer-0 input projection (input_size == 1): broadcast multiply, done
        # in-kernel so the wrapper stages no (T,B,512) intermediate through HBM.
        xp = (x_ref[:, s, :] * wih0) if s < T else 0.0
        gates = rec + xp + bias_b                  # (B, NG)

        # Gate columns [i0 i1 f0 f1 o0 o1 | g0 g1]: one sigmoid slab, one tanh
        # slab, then a single vectorized cell update for both layers.
        sig = jax.nn.sigmoid(gates[:, :SIGW])
        g_in = jnp.tanh(gates[:, SIGW:])
        i_cat = sig[:, 0 * STATE:1 * STATE]
        f_cat = sig[:, 1 * STATE:2 * STATE]
        o_cat = sig[:, 2 * STATE:3 * STATE]
        c = f_cat * c + i_cat * g_in
        h = o_cat * jnp.tanh(c)

        if s == 0:
            # Layer-1 must not advance at stage 0 (its true initial state is
            # zero); zero its half of the fused state once.
            h = jnp.where(layer0_mask, h, 0.0)
            c = jnp.where(layer0_mask, c, 0.0)

    # Final Linear(50, 1): VPU broadcast-multiply + lane reduction over the
    # layer-1 half of the fused state (wfc is zero on layer-0 / padded lanes).
    out_ref[...] = (jnp.sum(h * wfc_ref[...], axis=-1, keepdims=True)
                    + bfc_ref[...])


def _full_spec(shape):
    nd = len(shape)
    return pl.BlockSpec(shape, lambda i, _nd=nd: (0,) * _nd)


@jax.jit
def lstm_forward(x, w_big, wih0_big, bias_big, wfc, bfc):
    """x: (B, T, 1) float32 -> (B, 1) float32 (PyTorch LSTMModel.forward)."""
    B = x.shape[0]
    args = (x, w_big, wih0_big, bias_big, wfc, bfc)
    return pl.pallas_call(
        lstm_kernel,
        out_shape=jax.ShapeDtypeStruct((B, 1), jnp.float32),
        grid=(1,),
        in_specs=[_full_spec(a.shape) for a in args],
        out_specs=_full_spec((B, 1)),
        compiler_params=pltpu.CompilerParams(
            dimension_semantics=("arbitrary",)),
    )(*args)


# ---------------- parameter construction (deterministic, PyTorch-style) -----

def init_raw_params(key):
    """PyTorch-layout parameters, uniform(-1/sqrt(H), 1/sqrt(H))."""
    H, I = HIDDEN_SIZE, INPUT_SIZE
    bound = 1.0 / (H ** 0.5)
    keys = jax.random.split(key, 10)

    def u(k, shape):
        return jax.random.uniform(k, shape, jnp.float32, -bound, bound)

    return dict(
        w_ih_l0=u(keys[0], (4 * H, I)),
        w_hh_l0=u(keys[1], (4 * H, H)),
        b_ih_l0=u(keys[2], (4 * H,)),
        b_hh_l0=u(keys[3], (4 * H,)),
        w_ih_l1=u(keys[4], (4 * H, H)),
        w_hh_l1=u(keys[5], (4 * H, H)),
        b_ih_l1=u(keys[6], (4 * H,)),
        b_hh_l1=u(keys[7], (4 * H,)),
        w_fc=u(keys[8], (1, H)),
        b_fc=u(keys[9], (1,)),
    )


def _pad2(m, rows, cols):
    return jnp.pad(m, ((0, rows - m.shape[0]), (0, cols - m.shape[1])))


def _pad1(v, n):
    return jnp.pad(v, (0, n - v.shape[0]))


def repack_for_kernel(raw):
    """Pack PyTorch weights into the fused-skew layout used by the kernel.

    W_big rows   : [h0 units (50, pad to 64) | h1 units (50, pad to 64)]
    W_big columns: 8 blocks of 64 lanes, [i0 i1 f0 f1 o0 o1 g0 g1]
      layer-0 block (i0/f0/o0/g0): rows = [whh0 ; 0]
      layer-1 block (i1/f1/o1/g1): rows = [wih1 ; whh1]
    All padding is exactly zero so it never leaks into real lanes.
    """
    H = HIDDEN_SIZE

    def gate_mats(w, in_dim):
        # (4H, in_dim) PyTorch -> 4 x (in_dim, H) in order (i, f, o, g);
        # mat[k, j] = w[gate*H + j, k]  (rows = contraction units).
        w4 = w.reshape(4, H, in_dim)
        return [w4[p].T for p in GATE_PERM]

    whh0 = gate_mats(raw["w_hh_l0"], H)   # contraction over h0
    wih1 = gate_mats(raw["w_ih_l1"], H)   # contraction over h0 (layer-1 input)
    whh1 = gate_mats(raw["w_hh_l1"], H)   # contraction over h1

    zero_kb = jnp.zeros((HB, HB), jnp.float32)
    col_blocks = []
    for g in range(4):
        col_blocks.append(jnp.concatenate(
            [_pad2(whh0[g], HB, HB), zero_kb], axis=0))                  # layer-0
        col_blocks.append(jnp.concatenate(
            [_pad2(wih1[g], HB, HB), _pad2(whh1[g], HB, HB)], axis=0))   # layer-1
    w_big = jnp.concatenate(col_blocks, axis=1)            # (STATE, NG)

    def gate_vecs(v):
        v4 = v.reshape(4, H)
        return [v4[p] for p in GATE_PERM]

    wih0 = gate_vecs(raw["w_ih_l0"].reshape(4 * H))        # input_size == 1
    b0 = gate_vecs(raw["b_ih_l0"] + raw["b_hh_l0"])
    b1 = gate_vecs(raw["b_ih_l1"] + raw["b_hh_l1"])

    zero_b = jnp.zeros((HB,), jnp.float32)
    wih0_cols, bias_cols = [], []
    for g in range(4):
        wih0_cols += [_pad1(wih0[g], HB), zero_b]          # no x term for layer 1
        bias_cols += [_pad1(b0[g], HB), _pad1(b1[g], HB)]
    wih0_big = jnp.concatenate(wih0_cols).reshape(1, NG)
    bias_big = jnp.concatenate(bias_cols).reshape(1, NG)

    wfc = jnp.concatenate([jnp.zeros((HB,), jnp.float32),
                           _pad1(raw["w_fc"][0], HB)]).reshape(1, STATE)
    bfc = raw["b_fc"].reshape(1, 1)
    return w_big, wih0_big, bias_big, wfc, bfc


# ---------------- pure-JAX reference (PyTorch semantics) ---------------------

def reference_forward(x, raw):
    B, T, _ = x.shape
    H = HIDDEN_SIZE
    h = [jnp.zeros((B, H), jnp.float32) for _ in range(NUM_LAYERS)]
    c = [jnp.zeros((B, H), jnp.float32) for _ in range(NUM_LAYERS)]
    layers = [
        (raw["w_ih_l0"], raw["w_hh_l0"], raw["b_ih_l0"], raw["b_hh_l0"]),
        (raw["w_ih_l1"], raw["w_hh_l1"], raw["b_ih_l1"], raw["b_hh_l1"]),
    ]
    for t in range(T):
        inp = x[:, t, :]
        for l, (wih, whh, bih, bhh) in enumerate(layers):
            gates = inp @ wih.T + bih + h[l] @ whh.T + bhh
            i, f, g, o = jnp.split(gates, 4, axis=-1)
            i = jax.nn.sigmoid(i)
            f = jax.nn.sigmoid(f)
            g = jnp.tanh(g)
            o = jax.nn.sigmoid(o)
            c[l] = f * c[l] + i * g
            h[l] = o * jnp.tanh(c[l])
            inp = h[l]
    return h[-1] @ raw["w_fc"].T + raw["b_fc"]


if __name__ == "__main__":
    B, T = 2, 8
    key = jax.random.PRNGKey(0)
    kx, kp = jax.random.split(key)

    x = jax.random.normal(kx, (B, T, INPUT_SIZE), dtype=jnp.float32)
    raw = init_raw_params(kp)
    packed = repack_for_kernel(raw)

    out = lstm_forward(x, *packed)
    out = jax.block_until_ready(out)

    ref = reference_forward(x, raw)
    assert out.shape == (B, 1), out.shape
    assert jnp.allclose(out, ref, atol=1e-4, rtol=1e-4), (out, ref)

    print("KERNEL_OK")
</pallas_src>

<mosaic_0001>
module attributes {stable_mosaic.version = 11 : i64} {
  func.func @lstm_kernel(%arg0: i32, %arg1: memref<2x8x1xf32, #tpu.memory_space<vmem>>, %arg2: memref<128x512xf32, #tpu.memory_space<vmem>>, %arg3: memref<1x512xf32, #tpu.memory_space<vmem>>, %arg4: memref<1x512xf32, #tpu.memory_space<vmem>>, %arg5: memref<1x128xf32, #tpu.memory_space<vmem>>, %arg6: memref<1x1xf32, #tpu.memory_space<vmem>>, %arg7: memref<2x1xf32, #tpu.memory_space<vmem>>) attributes {dimension_semantics = [#tpu.dimension_semantics<arbitrary>], iteration_bounds = array<i64: 1>, scalar_prefetch = 0 : i64, scratch_operands = 0 : i64, tpu.core_type = #tpu.core_type<tc>, window_params = [{pipeline_mode = #tpu.pipeline_mode<synchronous>, transform_indices = @transform_0, window_bounds = array<i64: 2, 8, 1>}, {pipeline_mode = #tpu.pipeline_mode<synchronous>, transform_indices = @transform_1, window_bounds = array<i64: 128, 512>}, {pipeline_mode = #tpu.pipeline_mode<synchronous>, transform_indices = @transform_2, window_bounds = array<i64: 1, 512>}, {pipeline_mode = #tpu.pipeline_mode<synchronous>, transform_indices = @transform_3, window_bounds = array<i64: 1, 512>}, {pipeline_mode = #tpu.pipeline_mode<synchronous>, transform_indices = @transform_4, window_bounds = array<i64: 1, 128>}, {pipeline_mode = #tpu.pipeline_mode<synchronous>, transform_indices = @transform_5, window_bounds = array<i64: 1, 1>}, {pipeline_mode = #tpu.pipeline_mode<synchronous>, transform_indices = @transform_6, window_bounds = array<i64: 2, 1>}]} {
    %c0 = arith.constant 0 : index
    %c0_0 = arith.constant 0 : index
    %0 = vector.load %arg2[%c0, %c0_0] : memref<128x512xf32, #tpu.memory_space<vmem>>, vector<128x512xf32>
    %c0_1 = arith.constant 0 : index
    %c0_2 = arith.constant 0 : index
    %1 = vector.load %arg3[%c0_1, %c0_2] : memref<1x512xf32, #tpu.memory_space<vmem>>, vector<1x512xf32>
    %c0_3 = arith.constant 0 : index
    %c0_4 = arith.constant 0 : index
    %2 = vector.load %arg4[%c0_3, %c0_4] : memref<1x512xf32, #tpu.memory_space<vmem>>, vector<1x512xf32>
    %3 = vector.shape_cast %2 : vector<1x512xf32> to vector<1x512xf32>
    %4 = vector.broadcast %3 : vector<1x512xf32> to vector<2x512xf32>
    %5 = tpu.iota {dimensions = array<i32: 1>} : vector<2x128xi32>
    %c64_i32 = arith.constant 64 : i32
    %6 = vector.broadcast %c64_i32 : i32 to vector<2x128xi32>
    %7 = arith.cmpi slt, %5, %6 : vector<2x128xi32>
    %cst = arith.constant 0.000000e+00 : f32
    %8 = vector.broadcast %cst : f32 to vector<2x128xf32>
    %c0_5 = arith.constant 0 : index
    %c0_6 = arith.constant 0 : index
    %c0_7 = arith.constant 0 : index
    %9 = vector.load %arg1[%c0_5, %c0_6, %c0_7] : memref<2x8x1xf32, #tpu.memory_space<vmem>>, vector<2x1x1xf32>
    %10 = vector.shape_cast %9 : vector<2x1x1xf32> to vector<2x1xf32>
    %11 = vector.broadcast %10 : vector<2x1xf32> to vector<2x512xf32>
    %12 = vector.broadcast %1 : vector<1x512xf32> to vector<2x512xf32>
    %13 = arith.mulf %11, %12 : vector<2x512xf32>
    %cst_8 = arith.constant 0.000000e+00 : f32
    %14 = vector.broadcast %cst_8 : f32 to vector<2x512xf32>
    %15 = arith.addf %14, %13 : vector<2x512xf32>
    %16 = arith.addf %15, %4 : vector<2x512xf32>
    %17 = vector.extract_strided_slice %16 {offsets = [0, 0], sizes = [2, 384], strides = [1, 1]} : vector<2x512xf32> to vector<2x384xf32>
    %18 = arith.negf %17 : vector<2x384xf32>
    %19 = math.exp %18 : vector<2x384xf32>
    %cst_9 = arith.constant 1.000000e+00 : f32
    %20 = vector.broadcast %cst_9 : f32 to vector<2x384xf32>
    %21 = arith.addf %20, %19 : vector<2x384xf32>
    %22 = arith.divf %20, %21 : vector<2x384xf32>
    %23 = vector.extract_strided_slice %16 {offsets = [0, 384], sizes = [2, 128], strides = [1, 1]} : vector<2x512xf32> to vector<2x128xf32>
    %24 = math.tanh %23 : vector<2x128xf32>
    %25 = vector.extract_strided_slice %22 {offsets = [0, 0], sizes = [2, 128], strides = [1, 1]} : vector<2x384xf32> to vector<2x128xf32>
    %26 = vector.extract_strided_slice %22 {offsets = [0, 128], sizes = [2, 128], strides = [1, 1]} : vector<2x384xf32> to vector<2x128xf32>
    %27 = vector.extract_strided_slice %22 {offsets = [0, 256], sizes = [2, 128], strides = [1, 1]} : vector<2x384xf32> to vector<2x128xf32>
    %28 = arith.mulf %26, %8 : vector<2x128xf32>
    %29 = arith.mulf %25, %24 : vector<2x128xf32>
    %30 = arith.addf %28, %29 : vector<2x128xf32>
    %31 = math.tanh %30 : vector<2x128xf32>
    %32 = arith.mulf %27, %31 : vector<2x128xf32>
    %cst_10 = arith.constant 0.000000e+00 : f32
    %33 = vector.broadcast %cst_10 : f32 to vector<2x128xf32>
    %34 = arith.select %7, %32, %33 : vector<2x128xi1>, vector<2x128xf32>
    %cst_11 = arith.constant 0.000000e+00 : f32
    %35 = vector.broadcast %cst_11 : f32 to vector<2x128xf32>
    %36 = arith.select %7, %30, %35 : vector<2x128xi1>, vector<2x128xf32>
    %cst_12 = arith.constant dense<0.000000e+00> : vector<2x512xf32>
    %37 = tpu.matmul %34, %0, %cst_12 {dimension_numbers = #tpu.dot_dimension_numbers<[1], [0], [0], [1], [0, 0, 1, 1], [], []>} : vector<2x128xf32>, vector<128x512xf32>, vector<2x512xf32> -> vector<2x512xf32>
    %c0_13 = arith.constant 0 : index
    %c1 = arith.constant 1 : index
    %c0_14 = arith.constant 0 : index
    %38 = vector.load %arg1[%c0_13, %c1, %c0_14] : memref<2x8x1xf32, #tpu.memory_space<vmem>>, vector<2x1x1xf32>
    %39 = vector.shape_cast %38 : vector<2x1x1xf32> to vector<2x1xf32>
    %40 = vector.broadcast %39 : vector<2x1xf32> to vector<2x512xf32>
    %41 = vector.broadcast %1 : vector<1x512xf32> to vector<2x512xf32>
    %42 = arith.mulf %40, %41 : vector<2x512xf32>
    %43 = arith.addf %37, %42 : vector<2x512xf32>
    %44 = arith.addf %43, %4 : vector<2x512xf32>
    %45 = vector.extract_strided_slice %44 {offsets = [0, 0], sizes = [2, 384], strides = [1, 1]} : vector<2x512xf32> to vector<2x384xf32>
    %46 = arith.negf %45 : vector<2x384xf32>
    %47 = math.exp %46 : vector<2x384xf32>
    %cst_15 = arith.constant 1.000000e+00 : f32
    %48 = vector.broadcast %cst_15 : f32 to vector<2x384xf32>
    %49 = arith.addf %48, %47 : vector<2x384xf32>
    %50 = arith.divf %48, %49 : vector<2x384xf32>
    %51 = vector.extract_strided_slice %44 {offsets = [0, 384], sizes = [2, 128], strides = [1, 1]} : vector<2x512xf32> to vector<2x128xf32>
    %52 = math.tanh %51 : vector<2x128xf32>
    %53 = vector.extract_strided_slice %50 {offsets = [0, 0], sizes = [2, 128], strides = [1, 1]} : vector<2x384xf32> to vector<2x128xf32>
    %54 = vector.extract_strided_slice %50 {offsets = [0, 128], sizes = [2, 128], strides = [1, 1]} : vector<2x384xf32> to vector<2x128xf32>
    %55 = vector.extract_strided_slice %50 {offsets = [0, 256], sizes = [2, 128], strides = [1, 1]} : vector<2x384xf32> to vector<2x128xf32>
    %56 = arith.mulf %54, %36 : vector<2x128xf32>
    %57 = arith.mulf %53, %52 : vector<2x128xf32>
    %58 = arith.addf %56, %57 : vector<2x128xf32>
    %59 = math.tanh %58 : vector<2x128xf32>
    %60 = arith.mulf %55, %59 : vector<2x128xf32>
    %cst_16 = arith.constant dense<0.000000e+00> : vector<2x512xf32>
    %61 = tpu.matmul %60, %0, %cst_16 {dimension_numbers = #tpu.dot_dimension_numbers<[1], [0], [0], [1], [0, 0, 1, 1], [], []>} : vector<2x128xf32>, vector<128x512xf32>, vector<2x512xf32> -> vector<2x512xf32>
    %c0_17 = arith.constant 0 : index
    %c2 = arith.constant 2 : index
    %c0_18 = arith.constant 0 : index
    %62 = vector.load %arg1[%c0_17, %c2, %c0_18] : memref<2x8x1xf32, #tpu.memory_space<vmem>>, vector<2x1x1xf32>
    %63 = vector.shape_cast %62 : vector<2x1x1xf32> to vector<2x1xf32>
    %64 = vector.broadcast %63 : vector<2x1xf32> to vector<2x512xf32>
    %65 = vector.broadcast %1 : vector<1x512xf32> to vector<2x512xf32>
    %66 = arith.mulf %64, %65 : vector<2x512xf32>
    %67 = arith.addf %61, %66 : vector<2x512xf32>
    %68 = arith.addf %67, %4 : vector<2x512xf32>
    %69 = vector.extract_strided_slice %68 {offsets = [0, 0], sizes = [2, 384], strides = [1, 1]} : vector<2x512xf32> to vector<2x384xf32>
    %70 = arith.negf %69 : vector<2x384xf32>
    %71 = math.exp %70 : vector<2x384xf32>
    %cst_19 = arith.constant 1.000000e+00 : f32
    %72 = vector.broadcast %cst_19 : f32 to vector<2x384xf32>
    %73 = arith.addf %72, %71 : vector<2x384xf32>
    %74 = arith.divf %72, %73 : vector<2x384xf32>
    %75 = vector.extract_strided_slice %68 {offsets = [0, 384], sizes = [2, 128], strides = [1, 1]} : vector<2x512xf32> to vector<2x128xf32>
    %76 = math.tanh %75 : vector<2x128xf32>
    %77 = vector.extract_strided_slice %74 {offsets = [0, 0], sizes = [2, 128], strides = [1, 1]} : vector<2x384xf32> to vector<2x128xf32>
    %78 = vector.extract_strided_slice %74 {offsets = [0, 128], sizes = [2, 128], strides = [1, 1]} : vector<2x384xf32> to vector<2x128xf32>
    %79 = vector.extract_strided_slice %74 {offsets = [0, 256], sizes = [2, 128], strides = [1, 1]} : vector<2x384xf32> to vector<2x128xf32>
    %80 = arith.mulf %78, %58 : vector<2x128xf32>
    %81 = arith.mulf %77, %76 : vector<2x128xf32>
    %82 = arith.addf %80, %81 : vector<2x128xf32>
    %83 = math.tanh %82 : vector<2x128xf32>
    %84 = arith.mulf %79, %83 : vector<2x128xf32>
    %cst_20 = arith.constant dense<0.000000e+00> : vector<2x512xf32>
    %85 = tpu.matmul %84, %0, %cst_20 {dimension_numbers = #tpu.dot_dimension_numbers<[1], [0], [0], [1], [0, 0, 1, 1], [], []>} : vector<2x128xf32>, vector<128x512xf32>, vector<2x512xf32> -> vector<2x512xf32>
    %c0_21 = arith.constant 0 : index
    %c3 = arith.constant 3 : index
    %c0_22 = arith.constant 0 : index
    %86 = vector.load %arg1[%c0_21, %c3, %c0_22] : memref<2x8x1xf32, #tpu.memory_space<vmem>>, vector<2x1x1xf32>
    %87 = vector.shape_cast %86 : vector<2x1x1xf32> to vector<2x1xf32>
    %88 = vector.broadcast %87 : vector<2x1xf32> to vector<2x512xf32>
    %89 = vector.broadcast %1 : vector<1x512xf32> to vector<2x512xf32>
    %90 = arith.mulf %88, %89 : vector<2x512xf32>
    %91 = arith.addf %85, %90 : vector<2x512xf32>
    %92 = arith.addf %91, %4 : vector<2x512xf32>
    %93 = vector.extract_strided_slice %92 {offsets = [0, 0], sizes = [2, 384], strides = [1, 1]} : vector<2x512xf32> to vector<2x384xf32>
    %94 = arith.negf %93 : vector<2x384xf32>
    %95 = math.exp %94 : vector<2x384xf32>
    %cst_23 = arith.constant 1.000000e+00 : f32
    %96 = vector.broadcast %cst_23 : f32 to vector<2x384xf32>
    %97 = arith.addf %96, %95 : vector<2x384xf32>
    %98 = arith.divf %96, %97 : vector<2x384xf32>
    %99 = vector.extract_strided_slice %92 {offsets = [0, 384], sizes = [2, 128], strides = [1, 1]} : vector<2x512xf32> to vector<2x128xf32>
    %100 = math.tanh %99 : vector<2x128xf32>
    %101 = vector.extract_strided_slice %98 {offsets = [0, 0], sizes = [2, 128], strides = [1, 1]} : vector<2x384xf32> to vector<2x128xf32>
    %102 = vector.extract_strided_slice %98 {offsets = [0, 128], sizes = [2, 128], strides = [1, 1]} : vector<2x384xf32> to vector<2x128xf32>
    %103 = vector.extract_strided_slice %98 {offsets = [0, 256], sizes = [2, 128], strides = [1, 1]} : vector<2x384xf32> to vector<2x128xf32>
    %104 = arith.mulf %102, %82 : vector<2x128xf32>
    %105 = arith.mulf %101, %100 : vector<2x128xf32>
    %106 = arith.addf %104, %105 : vector<2x128xf32>
    %107 = math.tanh %106 : vector<2x128xf32>
    %108 = arith.mulf %103, %107 : vector<2x128xf32>
    %cst_24 = arith.constant dense<0.000000e+00> : vector<2x512xf32>
    %109 = tpu.matmul %108, %0, %cst_24 {dimension_numbers = #tpu.dot_dimension_numbers<[1], [0], [0], [1], [0, 0, 1, 1], [], []>} : vector<2x128xf32>, vector<128x512xf32>, vector<2x512xf32> -> vector<2x512xf32>
    %c0_25 = arith.constant 0 : index
    %c4 = arith.constant 4 : index
    %c0_26 = arith.constant 0 : index
    %110 = vector.load %arg1[%c0_25, %c4, %c0_26] : memref<2x8x1xf32, #tpu.memory_space<vmem>>, vector<2x1x1xf32>
    %111 = vector.shape_cast %110 : vector<2x1x1xf32> to vector<2x1xf32>
    %112 = vector.broadcast %111 : vector<2x1xf32> to vector<2x512xf32>
    %113 = vector.broadcast %1 : vector<1x512xf32> to vector<2x512xf32>
    %114 = arith.mulf %112, %113 : vector<2x512xf32>
    %115 = arith.addf %109, %114 : vector<2x512xf32>
    %116 = arith.addf %115, %4 : vector<2x512xf32>
    %117 = vector.extract_strided_slice %116 {offsets = [0, 0], sizes = [2, 384], strides = [1, 1]} : vector<2x512xf32> to vector<2x384xf32>
    %118 = arith.negf %117 : vector<2x384xf32>
    %119 = math.exp %118 : vector<2x384xf32>
    %cst_27 = arith.constant 1.000000e+00 : f32
    %120 = vector.broadcast %cst_27 : f32 to vector<2x384xf32>
    %121 = arith.addf %120, %119 : vector<2x384xf32>
    %122 = arith.divf %120, %121 : vector<2x384xf32>
    %123 = vector.extract_strided_slice %116 {offsets = [0, 384], sizes = [2, 128], strides = [1, 1]} : vector<2x512xf32> to vector<2x128xf32>
    %124 = math.tanh %123 : vector<2x128xf32>
    %125 = vector.extract_strided_slice %122 {offsets = [0, 0], sizes = [2, 128], strides = [1, 1]} : vector<2x384xf32> to vector<2x128xf32>
    %126 = vector.extract_strided_slice %122 {offsets = [0, 128], sizes = [2, 128], strides = [1, 1]} : vector<2x384xf32> to vector<2x128xf32>
    %127 = vector.extract_strided_slice %122 {offsets = [0, 256], sizes = [2, 128], strides = [1, 1]} : vector<2x384xf32> to vector<2x128xf32>
    %128 = arith.mulf %126, %106 : vector<2x128xf32>
    %129 = arith.mulf %125, %124 : vector<2x128xf32>
    %130 = arith.addf %128, %129 : vector<2x128xf32>
    %131 = math.tanh %130 : vector<2x128xf32>
    %132 = arith.mulf %127, %131 : vector<2x128xf32>
    %cst_28 = arith.constant dense<0.000000e+00> : vector<2x512xf32>
    %133 = tpu.matmul %132, %0, %cst_28 {dimension_numbers = #tpu.dot_dimension_numbers<[1], [0], [0], [1], [0, 0, 1, 1], [], []>} : vector<2x128xf32>, vector<128x512xf32>, vector<2x512xf32> -> vector<2x512xf32>
    %c0_29 = arith.constant 0 : index
    %c5 = arith.constant 5 : index
    %c0_30 = arith.constant 0 : index
    %134 = vector.load %arg1[%c0_29, %c5, %c0_30] : memref<2x8x1xf32, #tpu.memory_space<vmem>>, vector<2x1x1xf32>
    %135 = vector.shape_cast %134 : vector<2x1x1xf32> to vector<2x1xf32>
    %136 = vector.broadcast %135 : vector<2x1xf32> to vector<2x512xf32>
    %137 = vector.broadcast %1 : vector<1x512xf32> to vector<2x512xf32>
    %138 = arith.mulf %136, %137 : vector<2x512xf32>
    %139 = arith.addf %133, %138 : vector<2x512xf32>
    %140 = arith.addf %139, %4 : vector<2x512xf32>
    %141 = vector.extract_strided_slice %140 {offsets = [0, 0], sizes = [2, 384], strides = [1, 1]} : vector<2x512xf32> to vector<2x384xf32>
    %142 = arith.negf %141 : vector<2x384xf32>
    %143 = math.exp %142 : vector<2x384xf32>
    %cst_31 = arith.constant 1.000000e+00 : f32
    %144 = vector.broadcast %cst_31 : f32 to vector<2x384xf32>
    %145 = arith.addf %144, %143 : vector<2x384xf32>
    %146 = arith.divf %144, %145 : vector<2x384xf32>
    %147 = vector.extract_strided_slice %140 {offsets = [0, 384], sizes = [2, 128], strides = [1, 1]} : vector<2x512xf32> to vector<2x128xf32>
    %148 = math.tanh %147 : vector<2x128xf32>
    %149 = vector.extract_strided_slice %146 {offsets = [0, 0], sizes = [2, 128], strides = [1, 1]} : vector<2x384xf32> to vector<2x128xf32>
    %150 = vector.extract_strided_slice %146 {offsets = [0, 128], sizes = [2, 128], strides = [1, 1]} : vector<2x384xf32> to vector<2x128xf32>
    %151 = vector.extract_strided_slice %146 {offsets = [0, 256], sizes = [2, 128], strides = [1, 1]} : vector<2x384xf32> to vector<2x128xf32>
    %152 = arith.mulf %150, %130 : vector<2x128xf32>
    %153 = arith.mulf %149, %148 : vector<2x128xf32>
    %154 = arith.addf %152, %153 : vector<2x128xf32>
    %155 = math.tanh %154 : vector<2x128xf32>
    %156 = arith.mulf %151, %155 : vector<2x128xf32>
    %cst_32 = arith.constant dense<0.000000e+00> : vector<2x512xf32>
    %157 = tpu.matmul %156, %0, %cst_32 {dimension_numbers = #tpu.dot_dimension_numbers<[1], [0], [0], [1], [0, 0, 1, 1], [], []>} : vector<2x128xf32>, vector<128x512xf32>, vector<2x512xf32> -> vector<2x512xf32>
    %c0_33 = arith.constant 0 : index
    %c6 = arith.constant 6 : index
    %c0_34 = arith.constant 0 : index
    %158 = vector.load %arg1[%c0_33, %c6, %c0_34] : memref<2x8x1xf32, #tpu.memory_space<vmem>>, vector<2x1x1xf32>
    %159 = vector.shape_cast %158 : vector<2x1x1xf32> to vector<2x1xf32>
    %160 = vector.broadcast %159 : vector<2x1xf32> to vector<2x512xf32>
    %161 = vector.broadcast %1 : vector<1x512xf32> to vector<2x512xf32>
    %162 = arith.mulf %160, %161 : vector<2x512xf32>
    %163 = arith.addf %157, %162 : vector<2x512xf32>
    %164 = arith.addf %163, %4 : vector<2x512xf32>
    %165 = vector.extract_strided_slice %164 {offsets = [0, 0], sizes = [2, 384], strides = [1, 1]} : vector<2x512xf32> to vector<2x384xf32>
    %166 = arith.negf %165 : vector<2x384xf32>
    %167 = math.exp %166 : vector<2x384xf32>
    %cst_35 = arith.constant 1.000000e+00 : f32
    %168 = vector.broadcast %cst_35 : f32 to vector<2x384xf32>
    %169 = arith.addf %168, %167 : vector<2x384xf32>
    %170 = arith.divf %168, %169 : vector<2x384xf32>
    %171 = vector.extract_strided_slice %164 {offsets = [0, 384], sizes = [2, 128], strides = [1, 1]} : vector<2x512xf32> to vector<2x128xf32>
    %172 = math.tanh %171 : vector<2x128xf32>
    %173 = vector.extract_strided_slice %170 {offsets = [0, 0], sizes = [2, 128], strides = [1, 1]} : vector<2x384xf32> to vector<2x128xf32>
    %174 = vector.extract_strided_slice %170 {offsets = [0, 128], sizes = [2, 128], strides = [1, 1]} : vector<2x384xf32> to vector<2x128xf32>
    %175 = vector.extract_strided_slice %170 {offsets = [0, 256], sizes = [2, 128], strides = [1, 1]} : vector<2x384xf32> to vector<2x128xf32>
    %176 = arith.mulf %174, %154 : vector<2x128xf32>
    %177 = arith.mulf %173, %172 : vector<2x128xf32>
    %178 = arith.addf %176, %177 : vector<2x128xf32>
    %179 = math.tanh %178 : vector<2x128xf32>
    %180 = arith.mulf %175, %179 : vector<2x128xf32>
    %cst_36 = arith.constant dense<0.000000e+00> : vector<2x512xf32>
    %181 = tpu.matmul %180, %0, %cst_36 {dimension_numbers = #tpu.dot_dimension_numbers<[1], [0], [0], [1], [0, 0, 1, 1], [], []>} : vector<2x128xf32>, vector<128x512xf32>, vector<2x512xf32> -> vector<2x512xf32>
    %c0_37 = arith.constant 0 : index
    %c7 = arith.constant 7 : index
    %c0_38 = arith.constant 0 : index
    %182 = vector.load %arg1[%c0_37, %c7, %c0_38] : memref<2x8x1xf32, #tpu.memory_space<vmem>>, vector<2x1x1xf32>
    %183 = vector.shape_cast %182 : vector<2x1x1xf32> to vector<2x1xf32>
    %184 = vector.broadcast %183 : vector<2x1xf32> to vector<2x512xf32>
    %185 = vector.broadcast %1 : vector<1x512xf32> to vector<2x512xf32>
    %186 = arith.mulf %184, %185 : vector<2x512xf32>
    %187 = arith.addf %181, %186 : vector<2x512xf32>
    %188 = arith.addf %187, %4 : vector<2x512xf32>
    %189 = vector.extract_strided_slice %188 {offsets = [0, 0], sizes = [2, 384], strides = [1, 1]} : vector<2x512xf32> to vector<2x384xf32>
    %190 = arith.negf %189 : vector<2x384xf32>
    %191 = math.exp %190 : vector<2x384xf32>
    %cst_39 = arith.constant 1.000000e+00 : f32
    %192 = vector.broadcast %cst_39 : f32 to vector<2x384xf32>
    %193 = arith.addf %192, %191 : vector<2x384xf32>
    %194 = arith.divf %192, %193 : vector<2x384xf32>
    %195 = vector.extract_strided_slice %188 {offsets = [0, 384], sizes = [2, 128], strides = [1, 1]} : vector<2x512xf32> to vector<2x128xf32>
    %196 = math.tanh %195 : vector<2x128xf32>
    %197 = vector.extract_strided_slice %194 {offsets = [0, 0], sizes = [2, 128], strides = [1, 1]} : vector<2x384xf32> to vector<2x128xf32>
    %198 = vector.extract_strided_slice %194 {offsets = [0, 128], sizes = [2, 128], strides = [1, 1]} : vector<2x384xf32> to vector<2x128xf32>
    %199 = vector.extract_strided_slice %194 {offsets = [0, 256], sizes = [2, 128], strides = [1, 1]} : vector<2x384xf32> to vector<2x128xf32>
    %200 = arith.mulf %198, %178 : vector<2x128xf32>
    %201 = arith.mulf %197, %196 : vector<2x128xf32>
    %202 = arith.addf %200, %201 : vector<2x128xf32>
    %203 = math.tanh %202 : vector<2x128xf32>
    %204 = arith.mulf %199, %203 : vector<2x128xf32>
    %cst_40 = arith.constant dense<0.000000e+00> : vector<2x512xf32>
    %205 = tpu.matmul %204, %0, %cst_40 {dimension_numbers = #tpu.dot_dimension_numbers<[1], [0], [0], [1], [0, 0, 1, 1], [], []>} : vector<2x128xf32>, vector<128x512xf32>, vector<2x512xf32> -> vector<2x512xf32>
    %cst_41 = arith.constant 0.000000e+00 : f32
    %206 = vector.broadcast %cst_41 : f32 to vector<2x512xf32>
    %207 = arith.addf %205, %206 : vector<2x512xf32>
    %208 = arith.addf %207, %4 : vector<2x512xf32>
    %209 = vector.extract_strided_slice %208 {offsets = [0, 0], sizes = [2, 384], strides = [1, 1]} : vector<2x512xf32> to vector<2x384xf32>
    %210 = arith.negf %209 : vector<2x384xf32>
    %211 = math.exp %210 : vector<2x384xf32>
    %cst_42 = arith.constant 1.000000e+00 : f32
    %212 = vector.broadcast %cst_42 : f32 to vector<2x384xf32>
    %213 = arith.addf %212, %211 : vector<2x384xf32>
    %214 = arith.divf %212, %213 : vector<2x384xf32>
    %215 = vector.extract_strided_slice %208 {offsets = [0, 384], sizes = [2, 128], strides = [1, 1]} : vector<2x512xf32> to vector<2x128xf32>
    %216 = math.tanh %215 : vector<2x128xf32>
    %217 = vector.extract_strided_slice %214 {offsets = [0, 0], sizes = [2, 128], strides = [1, 1]} : vector<2x384xf32> to vector<2x128xf32>
    %218 = vector.extract_strided_slice %214 {offsets = [0, 128], sizes = [2, 128], strides = [1, 1]} : vector<2x384xf32> to vector<2x128xf32>
    %219 = vector.extract_strided_slice %214 {offsets = [0, 256], sizes = [2, 128], strides = [1, 1]} : vector<2x384xf32> to vector<2x128xf32>
    %220 = arith.mulf %218, %202 : vector<2x128xf32>
    %221 = arith.mulf %217, %216 : vector<2x128xf32>
    %222 = arith.addf %220, %221 : vector<2x128xf32>
    %223 = math.tanh %222 : vector<2x128xf32>
    %224 = arith.mulf %219, %223 : vector<2x128xf32>
    %c0_43 = arith.constant 0 : index
    %c0_44 = arith.constant 0 : index
    %225 = vector.load %arg5[%c0_43, %c0_44] : memref<1x128xf32, #tpu.memory_space<vmem>>, vector<1x128xf32>
    %226 = vector.broadcast %225 : vector<1x128xf32> to vector<2x128xf32>
    %227 = arith.mulf %224, %226 : vector<2x128xf32>
    %cst_45 = arith.constant dense<0.000000e+00> : vector<2xf32>
    %228 = vector.multi_reduction <add>, %227, %cst_45 [1] : vector<2x128xf32> to vector<2xf32>
    %229 = vector.shape_cast %228 : vector<2xf32> to vector<2x1xf32>
    %c0_46 = arith.constant 0 : index
    %c0_47 = arith.constant 0 : index
    %230 = vector.load %arg6[%c0_46, %c0_47] : memref<1x1xf32, #tpu.memory_space<vmem>>, vector<1x1xf32>
    %231 = vector.broadcast %230 : vector<1x1xf32> to vector<2x1xf32>
    %232 = arith.addf %229, %231 : vector<2x1xf32>
    %c0_48 = arith.constant 0 : index
    %c0_49 = arith.constant 0 : index
    %233 = vector.load %arg7[%c0_48, %c0_49] : memref<2x1xf32, #tpu.memory_space<vmem>>, vector<2x1xf32>
    tpu.vector_store %arg7[%c0_48, %c0_49], %232 {strides = array<i32>} : memref<2x1xf32, #tpu.memory_space<vmem>>, vector<2x1xf32>,
    return
  }
  func.func @transform_0(%arg0: i32) -> (i32, i32, i32) {
    %c0_i32 = arith.constant 0 : i32
    %c0_i32_0 = arith.constant 0 : i32
    %c0_i32_1 = arith.constant 0 : i32
    %c0_i32_2 = arith.constant 0 : i32
    return %c0_i32, %c0_i32_0, %c0_i32_1 : i32, i32, i32
  }
  func.func @transform_1(%arg0: i32) -> (i32, i32) {
    %c0_i32 = arith.constant 0 : i32
    %c0_i32_0 = arith.constant 0 : i32
    %c0_i32_1 = arith.constant 0 : i32
    return %c0_i32, %c0_i32_0 : i32, i32
  }
  func.func @transform_2(%arg0: i32) -> (i32, i32) {
    %c0_i32 = arith.constant 0 : i32
    %c0_i32_0 = arith.constant 0 : i32
    %c0_i32_1 = arith.constant 0 : i32
    return %c0_i32, %c0_i32_0 : i32, i32
  }
  func.func @transform_3(%arg0: i32) -> (i32, i32) {
    %c0_i32 = arith.constant 0 : i32
    %c0_i32_0 = arith.constant 0 : i32
    %c0_i32_1 = arith.constant 0 : i32
    return %c0_i32, %c0_i32_0 : i32, i32
  }
  func.func @transform_4(%arg0: i32) -> (i32, i32) {
    %c0_i32 = arith.constant 0 : i32
    %c0_i32_0 = arith.constant 0 : i32
    %c0_i32_1 = arith.constant 0 : i32
    return %c0_i32, %c0_i32_0 : i32, i32
  }
  func.func @transform_5(%arg0: i32) -> (i32, i32) {
    %c0_i32 = arith.constant 0 : i32
    %c0_i32_0 = arith.constant 0 : i32
    %c0_i32_1 = arith.constant 0 : i32
    return %c0_i32, %c0_i32_0 : i32, i32
  }
  func.func @transform_6(%arg0: i32) -> (i32, i32) {
    %c0_i32 = arith.constant 0 : i32
    %c0_i32_0 = arith.constant 0 : i32
    %c0_i32_1 = arith.constant 0 : i32
    return %c0_i32, %c0_i32_0 : i32, i32
  }
}

</mosaic_0001>

<llo_original>
// kernel: lstm_forward.1
$region0: #{lstm_forward.1}
  #allocation0 [shape = 'u32[]', space=smem, size = 0x4, offset = 0x4, fixed_abs, tag = 'smem constant byte address 0x4 - core index']
  #allocation1 [shape = 'u32[144,128]{1,0:T(1,128)}', space=vmem, size = 0x12000, scoped, tag = 'internal scratch']
  #allocation2 [shape = 'f32[1,1]{1,0:T(1,128)S(1)}', space=vmem, size = 0x200, scoped, tag = 'scoped memory for lstm_forward.1']
  %s0 = inlined_call_operand.vmem [shape: f32[2,8,1], index: 0, kind: input, shape index: {}]
  %s1 = inlined_call_operand.hbm [shape: f32[128,512], index: 1, kind: input, shape index: {}]
  %s2 = inlined_call_operand.vmem [shape: f32[1,512], index: 2, kind: input, shape index: {}]
  %s3 = inlined_call_operand.vmem [shape: f32[1,512], index: 3, kind: input, shape index: {}]
  %s4 = inlined_call_operand.vmem [shape: f32[1,128], index: 4, kind: input, shape index: {}]
  %s5 = inlined_call_operand.<no memory space> [shape: f32[1,1], index: 5, kind: input, shape index: {}]
  %s6 = inlined_call_operand.vmem [shape: f32[2,1], index: 6, kind: output, shape index: {}]
  %s7 = sld [smem:[#allocation0]]
  $region38: #{lstm_forward.1} parent=0
    _
  %s9 = ssub.s32 1, %s7
  %s10 = scalar_select 0, %s9, %s7
  %v11 = vstv %s5
  %12 = vst [vmem:[#allocation2] sm:$0x1] %v11
  $region1: #{lstm_forward.1} parent=0
    #allocation3 [shape = 'u8[262144]{0}', space=vmem, size = 0x40000, scoped, tag = 'input window, operand 1, single buffered']
    #allocation4 [shape = 's32[1]{0}', space=sflag, size = 0x4, scoped, tag = 'scoped memory for lstm_forward.1']
    %13 = vsyncpa [#allocation4], 0
    // Predicated region
    $region2: #{lstm_forward.1} parent=1 // pred_check
      _
    $region3: #{lstm_forward.1} parent=1 // pred_check_branch
      %15 = sbr.rel (0) target = $region5
    $region4: #{lstm_forward.1} parent=1 // pred_region
      _
    $region5: #{lstm_forward.1} parent=1 // pred_fallthru
      _
    // Predicated region
    $region6: #{lstm_forward.1} parent=1 // pred_check
      _
    $region7: #{lstm_forward.1} parent=1 // pred_check_branch
      %17 = sbr.rel (0) target = $region9
    $region8: #{lstm_forward.1} parent=1 // pred_region
      %s19 = ssub.s32 8192, 8192
      %20 = vsyncadd [#allocation4], %s19
      %s21 = sshll.u32 [#allocation3], 4
      %s22 = int_to_ptr.vmem [resolvable:$true] %s21
      %27 = dma.hbm_to_vmem [thread:$0]  %s1, 8192, %s22, [#allocation4], 512, 512, 32
    $region9: #{lstm_forward.1} parent=1 // pred_fallthru
      _
    // Predicated region
    $region10: #{lstm_forward.1} parent=1 // pred_check
      _
    $region11: #{lstm_forward.1} parent=1 // pred_check_branch
      %29 = sbr.rel (0) target = $region13
    $region12: #{lstm_forward.1} parent=1 // pred_region
      _
    $region13: #{lstm_forward.1} parent=1 // pred_fallthru
      _
    // Predicated region
    $region14: #{lstm_forward.1} parent=1 // pred_check
      _
    $region15: #{lstm_forward.1} parent=1 // pred_check_branch
      %31 = sbr.rel (0) target = $region17
    $region16: #{lstm_forward.1} parent=1 // pred_region
      _
    $region17: #{lstm_forward.1} parent=1 // pred_fallthru
      _
    // Predicated region
    $region18: #{lstm_forward.1} parent=1 // pred_check
      _
    $region19: #{lstm_forward.1} parent=1 // pred_check_branch
      %33 = sbr.rel (0) target = $region21
    $region20: #{lstm_forward.1} parent=1 // pred_region
      _
    $region21: #{lstm_forward.1} parent=1 // pred_fallthru
      _
    // Predicated region
    $region22: #{lstm_forward.1} parent=1 // pred_check
      _
    $region23: #{lstm_forward.1} parent=1 // pred_check_branch
      %35 = sbr.rel (0) target = $region25
    $region24: #{lstm_forward.1} parent=1 // pred_region
      _
    $region25: #{lstm_forward.1} parent=1 // pred_fallthru
      _
    // Predicated region
    $region26: #{lstm_forward.1} parent=1 // pred_check
      _
    $region27: #{lstm_forward.1} parent=1 // pred_check_branch
      %37 = sbr.rel (0) target = $region29
    $region28: #{lstm_forward.1} parent=1 // pred_region
      %38 = dma.done [#allocation4], 8192
    $region29: #{lstm_forward.1} parent=1 // pred_fallthru
      _
    %v39 = vld [vmem:[#allocation3] sm:$0xff]
    %v40 = vld [vmem:[#allocation3 + $0x8] sm:$0xff]
    %v41 = vld [vmem:[#allocation3 + $0x10] sm:$0xff]
    %v42 = vld [vmem:[#allocation3 + $0x18] sm:$0xff]
    %v43 = vld [vmem:[#allocation3 + $0x20] sm:$0xff]
    %v44 = vld [vmem:[#allocation3 + $0x28] sm:$0xff]
    %v45 = vld [vmem:[#allocation3 + $0x30] sm:$0xff]
    %v46 = vld [vmem:[#allocation3 + $0x38] sm:$0xff]
    %v47 = vld [vmem:[#allocation3 + $0x40] sm:$0xff]
    %v48 = vld [vmem:[#allocation3 + $0x48] sm:$0xff]
    %v49 = vld [vmem:[#allocation3 + $0x50] sm:$0xff]
    %v50 = vld [vmem:[#allocation3 + $0x58] sm:$0xff]
    %v51 = vld [vmem:[#allocation3 + $0x60] sm:$0xff]
    %v52 = vld [vmem:[#allocation3 + $0x68] sm:$0xff]
    %v53 = vld [vmem:[#allocation3 + $0x70] sm:$0xff]
    %v54 = vld [vmem:[#allocation3 + $0x78] sm:$0xff]
    %v55 = vld [vmem:[#allocation3 + $0x80] sm:$0xff]
    %v56 = vld [vmem:[#allocation3 + $0x88] sm:$0xff]
    %v57 = vld [vmem:[#allocation3 + $0x90] sm:$0xff]
    %v58 = vld [vmem:[#allocation3 + $0x98] sm:$0xff]
    %v59 = vld [vmem:[#allocation3 + $0xa0] sm:$0xff]
    %v60 = vld [vmem:[#allocation3 + $0xa8] sm:$0xff]
    %v61 = vld [vmem:[#allocation3 + $0xb0] sm:$0xff]
    %v62 = vld [vmem:[#allocation3 + $0xb8] sm:$0xff]
    %v63 = vld [vmem:[#allocation3 + $0xc0] sm:$0xff]
    %v64 = vld [vmem:[#allocation3 + $0xc8] sm:$0xff]
    %v65 = vld [vmem:[#allocation3 + $0xd0] sm:$0xff]
    %v66 = vld [vmem:[#allocation3 + $0xd8] sm:$0xff]
    %v67 = vld [vmem:[#allocation3 + $0xe0] sm:$0xff]
    %v68 = vld [vmem:[#allocation3 + $0xe8] sm:$0xff]
    %v69 = vld [vmem:[#allocation3 + $0xf0] sm:$0xff]
    %v70 = vld [vmem:[#allocation3 + $0xf8] sm:$0xff]
    %v71 = vld [vmem:[#allocation3 + $0x100] sm:$0xff]
    %v72 = vld [vmem:[#allocation3 + $0x108] sm:$0xff]
    %v73 = vld [vmem:[#allocation3 + $0x110] sm:$0xff]
    %v74 = vld [vmem:[#allocation3 + $0x118] sm:$0xff]
    %v75 = vld [vmem:[#allocation3 + $0x120] sm:$0xff]
    %v76 = vld [vmem:[#allocation3 + $0x128] sm:$0xff]
    %v77 = vld [vmem:[#allocation3 + $0x130] sm:$0xff]
    %v78 = vld [vmem:[#allocation3 + $0x138] sm:$0xff]
    %v79 = vld [vmem:[#allocation3 + $0x140] sm:$0xff]
    %v80 = vld [vmem:[#allocation3 + $0x148] sm:$0xff]
    %v81 = vld [vmem:[#allocation3 + $0x150] sm:$0xff]
    %v82 = vld [vmem:[#allocation3 + $0x158] sm:$0xff]
    %v83 = vld [vmem:[#allocation3 + $0x160] sm:$0xff]
    %v84 = vld [vmem:[#allocation3 + $0x168] sm:$0xff]
    %v85 = vld [vmem:[#allocation3 + $0x170] sm:$0xff]
    %v86 = vld [vmem:[#allocation3 + $0x178] sm:$0xff]
    %v87 = vld [vmem:[#allocation3 + $0x180] sm:$0xff]
    %v88 = vld [vmem:[#allocation3 + $0x188] sm:$0xff]
    %v89 = vld [vmem:[#allocation3 + $0x190] sm:$0xff]
    %v90 = vld [vmem:[#allocation3 + $0x198] sm:$0xff]
    %v91 = vld [vmem:[#allocation3 + $0x1a0] sm:$0xff]
    %v92 = vld [vmem:[#allocation3 + $0x1a8] sm:$0xff]
    %v93 = vld [vmem:[#allocation3 + $0x1b0] sm:$0xff]
    %v94 = vld [vmem:[#allocation3 + $0x1b8] sm:$0xff]
    %v95 = vld [vmem:[#allocation3 + $0x1c0] sm:$0xff]
    %v96 = vld [vmem:[#allocation3 + $0x1c8] sm:$0xff]
    %v97 = vld [vmem:[#allocation3 + $0x1d0] sm:$0xff]
    %v98 = vld [vmem:[#allocation3 + $0x1d8] sm:$0xff]
    %v99 = vld [vmem:[#allocation3 + $0x1e0] sm:$0xff]
    %v100 = vld [vmem:[#allocation3 + $0x1e8] sm:$0xff]
    %v101 = vld [vmem:[#allocation3 + $0x1f0] sm:$0xff]
    %v102 = vld [vmem:[#allocation3 + $0x1f8] sm:$0xff]
    %v103 = vld [vmem:[%s2] sm:$0xf]
    %v104 = vld [vmem:[%s3] sm:$0xf]
    %v106 = vlaneseq
    %v107 = vshrl.u32 %v106, 7
    %v108 = vsub.s32 0, %v107
    %v109 = vrot.slane %v104, %v108
    %v110 = vlaneseq
    %v111 = vshrl.u32 %v110, 7
    %v112 = vsub.s32 1, %v111
    %v113 = vrot.slane %v104, %v112
    %v114 = vlaneseq
    %v115 = vshrl.u32 %v114, 7
    %v116 = vsub.s32 2, %v115
    %v117 = vrot.slane %v104, %v116
    %v118 = vlaneseq
    %v119 = vshrl.u32 %v118, 7
    %v120 = vsub.s32 3, %v119
    %v121 = vrot.slane %v104, %v120
    %v126 = vlaneseq
    %v127 = vand.u32 %v126, 127
    %vm128 = vcmp.lt.s32.totalorder %v127, 64
    %v129 = vld [vmem:[%s0] sm:$0x1]
    %v130 = vld [vmem:[%s0 + $0x8] sm:$0x1]
    %132 = vset.pattern.permute.xlu0 0
    %133 = vperm.xlu0 %132, %v129
    %v134 = vpop.permute.xlu0 %133
    %137 = vset.pattern.permute.xlu0 0
    %138 = vperm.xlu0 %137, %v130
    %v139 = vpop.permute.xlu0 %138
    %v142 = vlaneseq
    %v143 = vshrl.u32 %v142, 7
    %v144 = vsub.s32 0, %v143
    %v145 = vrot.slane %v103, %v144
    %v146 = vlaneseq
    %v147 = vshrl.u32 %v146, 7
    %v148 = vsub.s32 1, %v147
    %v149 = vrot.slane %v103, %v148
    %v150 = vlaneseq
    %v151 = vshrl.u32 %v150, 7
    %v152 = vsub.s32 2, %v151
    %v153 = vrot.slane %v103, %v152
    %v154 = vlaneseq
    %v155 = vshrl.u32 %v154, 7
    %v156 = vsub.s32 3, %v155
    %v157 = vrot.slane %v103, %v156
    %v162 = vmul.f32 %v134, %v145
    %v163 = vmul.f32 %v134, %v149
    %v164 = vmul.f32 %v134, %v153
    %v165 = vmul.f32 %v134, %v157
    %v166 = vmul.f32 %v139, %v145
    %v167 = vmul.f32 %v139, %v149
    %v168 = vmul.f32 %v139, %v153
    %v169 = vmul.f32 %v139, %v157
    %v170 = vadd.f32 %v162, 0.0
    %v171 = vadd.f32 %v163, 0.0
    %v172 = vadd.f32 %v164, 0.0
    %v173 = vadd.f32 %v165, 0.0
    %v174 = vadd.f32 %v166, 0.0
    %v175 = vadd.f32 %v167, 0.0
    %v176 = vadd.f32 %v168, 0.0
    %v177 = vadd.f32 %v169, 0.0
    %v178 = vadd.f32 %v170, %v109
    %v179 = vadd.f32 %v171, %v113
    %v180 = vadd.f32 %v172, %v117
    %v181 = vadd.f32 %v173, %v121
    %v182 = vadd.f32 %v174, %v109
    %v183 = vadd.f32 %v175, %v113
    %v184 = vadd.f32 %v176, %v117
    %v185 = vadd.f32 %v177, %v121
    %v186 = vxor.u32 %v178, 2147483648
    %v187 = vxor.u32 %v179, 2147483648
    %v188 = vxor.u32 %v180, 2147483648
    %v189 = vxor.u32 %v182, 2147483648
    %v190 = vxor.u32 %v183, 2147483648
    %v191 = vxor.u32 %v184, 2147483648
    %v192 = vmul.f32 %v186, 1.442695
    %v193 = vpow.pop %v192
    %v194 = vmul.f32 %v187, 1.442695
    %v195 = vpow.pop %v194
    %v196 = vmul.f32 %v188, 1.442695
    %v197 = vpow.pop %v196
    %v198 = vmul.f32 %v189, 1.442695
    %v199 = vpow.pop %v198
    %v200 = vmul.f32 %v190, 1.442695
    %v201 = vpow.pop %v200
    %v202 = vmul.f32 %v191, 1.442695
    %v203 = vpow.pop %v202
    %v204 = vadd.f32 %v193, 1.0
    %v205 = vadd.f32 %v195, 1.0
    %v206 = vadd.f32 %v197, 1.0
    %v207 = vadd.f32 %v199, 1.0
    %v208 = vadd.f32 %v201, 1.0
    %v209 = vadd.f32 %v203, 1.0
    %v210 = vrcp.pop %v204
    %v211 = vmul.f32 1.0, %v210
    %v212 = vrcp.pop %v205
    %v213 = vmul.f32 1.0, %v212
    %v214 = vrcp.pop %v206
    %v215 = vmul.f32 1.0, %v214
    %v216 = vrcp.pop %v207
    %v217 = vmul.f32 1.0, %v216
    %v218 = vrcp.pop %v208
    %v219 = vmul.f32 1.0, %v218
    %v220 = vrcp.pop %v209
    %v221 = vmul.f32 1.0, %v220
    %v222 = vtanh.pop %v181
    %v223 = vtanh.pop %v185
    %v224 = vmul.f32 %v213, 0.0
    %v225 = vmul.f32 %v219, 0.0
    %v226 = vmul.f32 %v211, %v222
    %v227 = vmul.f32 %v217, %v223
    %v228 = vadd.f32 %v224, %v226
    %v229 = vadd.f32 %v225, %v227
    %v230 = vtanh.pop %v228
    %v231 = vtanh.pop %v229
    %v232 = vmul.f32 %v215, %v230
    %v233 = vmul.f32 %v221, %v231
    %v236 = vrot.slane %v233, 7
    %vm237 = vcmask 1041409
    %v238 = vsel %vm237, %v236, %v232
    %v240 = vsel %vm128, %v238, 0.0
    %v243 = vrot.slane %v229, 7
    %v244 = vsel %vm237, %v243, %v228
    %v246 = vsel %vm128, %v244, 0.0
    %v247 = vld [vmem:[%s0 + $0x1] sm:$0x1]
    %v248 = vld [vmem:[%s0 + $0x9] sm:$0x1]
    %250 = vset.pattern.permute.xlu0 0
    %251 = vperm.xlu0 %250, %v247
    %v252 = vpop.permute.xlu0 %251
    %255 = vset.pattern.permute.xlu0 0
    %256 = vperm.xlu0 %255, %v248
    %v257 = vpop.permute.xlu0 %256
    %v259 = vmul.f32 %v252, %v145
    %v260 = vmul.f32 %v252, %v149
    %v261 = vmul.f32 %v252, %v153
    %v262 = vmul.f32 %v252, %v157
    %v263 = vmul.f32 %v257, %v145
    %v264 = vmul.f32 %v257, %v149
    %v265 = vmul.f32 %v257, %v153
    %v266 = vmul.f32 %v257, %v157
    %v275 = vrot.slane %v263, 7
    %v276 = vsel %vm237, %v275, %v259
    %v277 = vrot.slane %v264, 7
    %v278 = vsel %vm237, %v277, %v260
    %v279 = vrot.slane %v265, 7
    %v280 = vsel %vm237, %v279, %v261
    %v281 = vrot.slane %v266, 7
    %v282 = vsel %vm237, %v281, %v262
    %287 = vmatprep.subr.mxu0 %v40
    %288 = vmatpush1.msra.mxu0 %v39
    %289 = vmatprep.subr.mxu0 %v44
    %290 = vmatpush1.msra.mxu0 %v43
    %291 = vmatprep.subr.mxu0 %v48
    %292 = vmatpush1.msra.mxu0 %v47
    %293 = vmatprep.subr.mxu0 %v52
    %294 = vmatpush1.msra.mxu0 %v51
    %295 = vmatprep.subr.mxu0 %v56
    %296 = vmatpush1.msra.mxu0 %v55
    %297 = vmatprep.subr.mxu0 %v60
    %298 = vmatpush1.msra.mxu0 %v59
    %299 = vmatprep.subr.mxu0 %v64
    %300 = vmatpush1.msra.mxu0 %v63
    %301 = vmatprep.subr.mxu0 %v68
    %302 = vmatpush1.msra.mxu0 %v67
    %303 = vmatprep.subr.mxu0 %v72
    %304 = vmatpush1.msra.mxu0 %v71
    %305 = vmatprep.subr.mxu0 %v76
    %306 = vmatpush1.msra.mxu0 %v75
    %307 = vmatprep.subr.mxu0 %v80
    %308 = vmatpush1.msra.mxu0 %v79
    %309 = vmatprep.subr.mxu0 %v84
    %310 = vmatpush1.msra.mxu0 %v83
    %311 = vmatprep.subr.mxu0 %v88
    %312 = vmatpush1.msra.mxu0 %v87
    %313 = vmatprep.subr.mxu0 %v92
    %314 = vmatpush1.msra.mxu0 %v91
    %315 = vmatprep.subr.mxu0 %v96
    %316 = vmatpush1.msra.mxu0 %v95
    %317 = vmatprep.subr.mxu0 %v100
    %318 = vmatpush1.msra.mxu0 %v99
    %319 = vmatprep.subr.mxu0 0.0
    %320 = vmatpush1.msra.mxu0 0.0
    %321 = vmatprep.subr.mxu0 0.0
    %322 = vmatpush1.msra.mxu0 0.0
    %323 = vmatprep.subr.mxu0 0.0
    %324 = vmatpush1.msra.mxu0 0.0
    %325 = vmatprep.subr.mxu0 0.0
    %326 = vmatpush1.msra.mxu0 0.0
    %327 = vmatprep.subr.mxu0 0.0
    %328 = vmatpush1.msra.mxu0 0.0
    %329 = vmatprep.subr.mxu0 0.0
    %330 = vmatpush1.msra.mxu0 0.0
    %331 = vmatprep.subr.mxu0 0.0
    %332 = vmatpush1.msra.mxu0 0.0
    %333 = vmatprep.subr.mxu0 0.0
    %334 = vmatpush1.msra.mxu0 0.0
    %335 = vmatprep.subr.mxu0 0.0
    %336 = vmatpush1.msra.mxu0 0.0
    %337 = vmatprep.subr.mxu0 0.0
    %338 = vmatpush1.msra.mxu0 0.0
    %339 = vmatprep.subr.mxu0 0.0
    %340 = vmatpush1.msra.mxu0 0.0
    %341 = vmatprep.subr.mxu0 0.0
    %342 = vmatpush1.msra.mxu0 0.0
    %343 = vmatprep.subr.mxu0 0.0
    %344 = vmatpush1.msra.mxu0 0.0
    %345 = vmatprep.subr.mxu0 0.0
    %346 = vmatpush1.msra.mxu0 0.0
    %347 = vmatprep.subr.mxu0 0.0
    %348 = vmatpush1.msra.mxu0 0.0
    %349 = vmatprep.subr.mxu0 0.0
    %350 = vmatpush1.msra.mxu0 0.0
    %351 = vmatprep.mubr.f32.mxu0 0.0
    %352 = vmatmul.mubr.f32.gmra.mrb[0].mxu0 %v240
    %v353 = vpop.f32.mrb[0].mxu0
    %v354 = vadd.f32 %v276, %v353
    %v355 = vpop.f32.mrb[0].mxu0
    %v356 = vadd.f32 %v278, %v355
    %357 = vdwg.mxu0
    %358 = vmatprep.subr.mxu0 %v42
    %359 = vmatpush1.msra.mxu0 %v41
    %360 = vmatprep.subr.mxu0 %v46
    %361 = vmatpush1.msra.mxu0 %v45
    %362 = vmatprep.subr.mxu0 %v50
    %363 = vmatpush1.msra.mxu0 %v49
    %364 = vmatprep.subr.mxu0 %v54
    %365 = vmatpush1.msra.mxu0 %v53
    %366 = vmatprep.subr.mxu0 %v58
    %367 = vmatpush1.msra.mxu0 %v57
    %368 = vmatprep.subr.mxu0 %v62
    %369 = vmatpush1.msra.mxu0 %v61
    %370 = vmatprep.subr.mxu0 %v66
    %371 = vmatpush1.msra.mxu0 %v65
    %372 = vmatprep.subr.mxu0 %v70
    %373 = vmatpush1.msra.mxu0 %v69
    %374 = vmatprep.subr.mxu0 %v74
    %375 = vmatpush1.msra.mxu0 %v73
    %376 = vmatprep.subr.mxu0 %v78
    %377 = vmatpush1.msra.mxu0 %v77
    %378 = vmatprep.subr.mxu0 %v82
    %379 = vmatpush1.msra.mxu0 %v81
    %380 = vmatprep.subr.mxu0 %v86
    %381 = vmatpush1.msra.mxu0 %v85
    %382 = vmatprep.subr.mxu0 %v90
    %383 = vmatpush1.msra.mxu0 %v89
    %384 = vmatprep.subr.mxu0 %v94
    %385 = vmatpush1.msra.mxu0 %v93
    %386 = vmatprep.subr.mxu0 %v98
    %387 = vmatpush1.msra.mxu0 %v97
    %388 = vmatprep.subr.mxu0 %v102
    %389 = vmatpush1.msra.mxu0 %v101
    %390 = vmatprep.subr.mxu0 0.0
    %391 = vmatpush1.msra.mxu0 0.0
    %392 = vmatprep.subr.mxu0 0.0
    %393 = vmatpush1.msra.mxu0 0.0
    %394 = vmatprep.subr.mxu0 0.0
    %395 = vmatpush1.msra.mxu0 0.0
    %396 = vmatprep.subr.mxu0 0.0
    %397 = vmatpush1.msra.mxu0 0.0
    %398 = vmatprep.subr.mxu0 0.0
    %399 = vmatpush1.msra.mxu0 0.0
    %400 = vmatprep.subr.mxu0 0.0
    %401 = vmatpush1.msra.mxu0 0.0
    %402 = vmatprep.subr.mxu0 0.0
    %403 = vmatpush1.msra.mxu0 0.0
    %404 = vmatprep.subr.mxu0 0.0
    %405 = vmatpush1.msra.mxu0 0.0
    %406 = vmatprep.subr.mxu0 0.0
    %407 = vmatpush1.msra.mxu0 0.0
    %408 = vmatprep.subr.mxu0 0.0
    %409 = vmatpush1.msra.mxu0 0.0
    %410 = vmatprep.subr.mxu0 0.0
    %411 = vmatpush1.msra.mxu0 0.0
    %412 = vmatprep.subr.mxu0 0.0
    %413 = vmatpush1.msra.mxu0 0.0
    %414 = vmatprep.subr.mxu0 0.0
    %415 = vmatpush1.msra.mxu0 0.0
    %416 = vmatprep.subr.mxu0 0.0
    %417 = vmatpush1.msra.mxu0 0.0
    %418 = vmatprep.subr.mxu0 0.0
    %419 = vmatpush1.msra.mxu0 0.0
    %420 = vmatprep.subr.mxu0 0.0
    %421 = vmatpush1.msra.mxu0 0.0
    %422 = vmatprep.mubr.f32.mxu0 0.0
    %423 = vmatmul.mubr.f32.gmra.mrb[0].mxu0 %v240
    %v424 = vpop.f32.mrb[0].mxu0
    %v425 = vadd.f32 %v280, %v424
    %v426 = vpop.f32.mrb[0].mxu0
    %v427 = vadd.f32 %v282, %v426
    %428 = vdwg.mxu0
    %v429 = vadd.f32 %v354, %v109
    %v430 = vadd.f32 %v356, %v113
    %v431 = vadd.f32 %v425, %v117
    %v432 = vadd.f32 %v427, %v121
    %v433 = vxor.u32 %v429, 2147483648
    %v434 = vxor.u32 %v430, 2147483648
    %v435 = vxor.u32 %v431, 2147483648
    %v436 = vmul.f32 %v433, 1.442695
    %v437 = vpow.pop %v436
    %v438 = vmul.f32 %v434, 1.442695
    %v439 = vpow.pop %v438
    %v440 = vmul.f32 %v435, 1.442695
    %v441 = vpow.pop %v440
    %v442 = vadd.f32 %v437, 1.0
    %v443 = vadd.f32 %v439, 1.0
    %v444 = vadd.f32 %v441, 1.0
    %v445 = vrcp.pop %v442
    %v446 = vmul.f32 1.0, %v445
    %v447 = vrcp.pop %v443
    %v448 = vmul.f32 1.0, %v447
    %v449 = vrcp.pop %v444
    %v450 = vmul.f32 1.0, %v449
    %v451 = vtanh.pop %v432
    %v452 = vmul.f32 %v448, %v246
    %v453 = vmul.f32 %v446, %v451
    %v454 = vadd.f32 %v452, %v453
    %v455 = vtanh.pop %v454
    %v456 = vmul.f32 %v450, %v455
    %v457 = vld [vmem:[%s0 + $0x2] sm:$0x1]
    %v458 = vld [vmem:[%s0 + $0xa] sm:$0x1]
    %460 = vset.pattern.permute.xlu0 0
    %461 = vperm.xlu0 %460, %v457
    %v462 = vpop.permute.xlu0 %461
    %465 = vset.pattern.permute.xlu0 0
    %466 = vperm.xlu0 %465, %v458
    %v467 = vpop.permute.xlu0 %466
    %v469 = vmul.f32 %v462, %v145
    %v470 = vmul.f32 %v462, %v149
    %v471 = vmul.f32 %v462, %v153
    %v472 = vmul.f32 %v462, %v157
    %v473 = vmul.f32 %v467, %v145
    %v474 = vmul.f32 %v467, %v149
    %v475 = vmul.f32 %v467, %v153
    %v476 = vmul.f32 %v467, %v157
    %v485 = vrot.slane %v473, 7
    %v486 = vsel %vm237, %v485, %v469
    %v487 = vrot.slane %v474, 7
    %v488 = vsel %vm237, %v487, %v470
    %v489 = vrot.slane %v475, 7
    %v490 = vsel %vm237, %v489, %v471
    %v491 = vrot.slane %v476, 7
    %v492 = vsel %vm237, %v491, %v472
    %497 = vmatprep.subr.mxu0 %v40
    %498 = vmatpush1.msra.mxu0 %v39
    %499 = vmatprep.subr.mxu0 %v44
    %500 = vmatpush1.msra.mxu0 %v43
    %501 = vmatprep.subr.mxu0 %v48
    %502 = vmatpush1.msra.mxu0 %v47
    %503 = vmatprep.subr.mxu0 %v52
    %504 = vmatpush1.msra.mxu0 %v51
    %505 = vmatprep.subr.mxu0 %v56
    %506 = vmatpush1.msra.mxu0 %v55
    %507 = vmatprep.subr.mxu0 %v60
    %508 = vmatpush1.msra.mxu0 %v59
    %509 = vmatprep.subr.mxu0 %v64
    %510 = vmatpush1.msra.mxu0 %v63
    %511 = vmatprep.subr.mxu0 %v68
    %512 = vmatpush1.msra.mxu0 %v67
    %513 = vmatprep.subr.mxu0 %v72
    %514 = vmatpush1.msra.mxu0 %v71
    %515 = vmatprep.subr.mxu0 %v76
    %516 = vmatpush1.msra.mxu0 %v75
    %517 = vmatprep.subr.mxu0 %v80
    %518 = vmatpush1.msra.mxu0 %v79
    %519 = vmatprep.subr.mxu0 %v84
    %520 = vmatpush1.msra.mxu0 %v83
    %521 = vmatprep.subr.mxu0 %v88
    %522 = vmatpush1.msra.mxu0 %v87
    %523 = vmatprep.subr.mxu0 %v92
    %524 = vmatpush1.msra.mxu0 %v91
    %525 = vmatprep.subr.mxu0 %v96
    %526 = vmatpush1.msra.mxu0 %v95
    %527 = vmatprep.subr.mxu0 %v100
    %528 = vmatpush1.msra.mxu0 %v99
    %529 = vmatprep.subr.mxu0 0.0
    %530 = vmatpush1.msra.mxu0 0.0
    %531 = vmatprep.subr.mxu0 0.0
    %532 = vmatpush1.msra.mxu0 0.0
    %533 = vmatprep.subr.mxu0 0.0
    %534 = vmatpush1.msra.mxu0 0.0
    %535 = vmatprep.subr.mxu0 0.0
    %536 = vmatpush1.msra.mxu0 0.0
    %537 = vmatprep.subr.mxu0 0.0
    %538 = vmatpush1.msra.mxu0 0.0
    %539 = vmatprep.subr.mxu0 0.0
    %540 = vmatpush1.msra.mxu0 0.0
    %541 = vmatprep.subr.mxu0 0.0
    %542 = vmatpush1.msra.mxu0 0.0
    %543 = vmatprep.subr.mxu0 0.0
    %544 = vmatpush1.msra.mxu0 0.0
    %545 = vmatprep.subr.mxu0 0.0
    %546 = vmatpush1.msra.mxu0 0.0
    %547 = vmatprep.subr.mxu0 0.0
    %548 = vmatpush1.msra.mxu0 0.0
    %549 = vmatprep.subr.mxu0 0.0
    %550 = vmatpush1.msra.mxu0 0.0
    %551 = vmatprep.subr.mxu0 0.0
    %552 = vmatpush1.msra.mxu0 0.0
    %553 = vmatprep.subr.mxu0 0.0
    %554 = vmatpush1.msra.mxu0 0.0
    %555 = vmatprep.subr.mxu0 0.0
    %556 = vmatpush1.msra.mxu0 0.0
    %557 = vmatprep.subr.mxu0 0.0
    %558 = vmatpush1.msra.mxu0 0.0
    %559 = vmatprep.subr.mxu0 0.0
    %560 = vmatpush1.msra.mxu0 0.0
    %561 = vmatprep.mubr.f32.mxu0 0.0
    %562 = vmatmul.mubr.f32.gmra.mrb[0].mxu0 %v456
    %v563 = vpop.f32.mrb[0].mxu0
    %v564 = vadd.f32 %v486, %v563
    %v565 = vpop.f32.mrb[0].mxu0
    %v566 = vadd.f32 %v488, %v565
    %567 = vdwg.mxu0
    %568 = vmatprep.subr.mxu0 %v42
    %569 = vmatpush1.msra.mxu0 %v41
    %570 = vmatprep.subr.mxu0 %v46
    %571 = vmatpush1.msra.mxu0 %v45
    %572 = vmatprep.subr.mxu0 %v50
    %573 = vmatpush1.msra.mxu0 %v49
    %574 = vmatprep.subr.mxu0 %v54
    %575 = vmatpush1.msra.mxu0 %v53
    %576 = vmatprep.subr.mxu0 %v58
    %577 = vmatpush1.msra.mxu0 %v57
    %578 = vmatprep.subr.mxu0 %v62
    %579 = vmatpush1.msra.mxu0 %v61
    %580 = vmatprep.subr.mxu0 %v66
    %581 = vmatpush1.msra.mxu0 %v65
    %582 = vmatprep.subr.mxu0 %v70
    %583 = vmatpush1.msra.mxu0 %v69
    %584 = vmatprep.subr.mxu0 %v74
    %585 = vmatpush1.msra.mxu0 %v73
    %586 = vmatprep.subr.mxu0 %v78
    %587 = vmatpush1.msra.mxu0 %v77
    %588 = vmatprep.subr.mxu0 %v82
    %589 = vmatpush1.msra.mxu0 %v81
    %590 = vmatprep.subr.mxu0 %v86
    %591 = vmatpush1.msra.mxu0 %v85
    %592 = vmatprep.subr.mxu0 %v90
    %593 = vmatpush1.msra.mxu0 %v89
    %594 = vmatprep.subr.mxu0 %v94
    %595 = vmatpush1.msra.mxu0 %v93
    %596 = vmatprep.subr.mxu0 %v98
    %597 = vmatpush1.msra.mxu0 %v97
    %598 = vmatprep.subr.mxu0 %v102
    %599 = vmatpush1.msra.mxu0 %v101
    %600 = vmatprep.subr.mxu0 0.0
    %601 = vmatpush1.msra.mxu0 0.0
    %602 = vmatprep.subr.mxu0 0.0
    %603 = vmatpush1.msra.mxu0 0.0
    %604 = vmatprep.subr.mxu0 0.0
    %605 = vmatpush1.msra.mxu0 0.0
    %606 = vmatprep.subr.mxu0 0.0
    %607 = vmatpush1.msra.mxu0 0.0
    %608 = vmatprep.subr.mxu0 0.0
    %609 = vmatpush1.msra.mxu0 0.0
    %610 = vmatprep.subr.mxu0 0.0
    %611 = vmatpush1.msra.mxu0 0.0
    %612 = vmatprep.subr.mxu0 0.0
    %613 = vmatpush1.msra.mxu0 0.0
    %614 = vmatprep.subr.mxu0 0.0
    %615 = vmatpush1.msra.mxu0 0.0
    %616 = vmatprep.subr.mxu0 0.0
    %617 = vmatpush1.msra.mxu0 0.0
    %618 = vmatprep.subr.mxu0 0.0
    %619 = vmatpush1.msra.mxu0 0.0
    %620 = vmatprep.subr.mxu0 0.0
    %621 = vmatpush1.msra.mxu0 0.0
    %622 = vmatprep.subr.mxu0 0.0
    %623 = vmatpush1.msra.mxu0 0.0
    %624 = vmatprep.subr.mxu0 0.0
    %625 = vmatpush1.msra.mxu0 0.0
    %626 = vmatprep.subr.mxu0 0.0
    %627 = vmatpush1.msra.mxu0 0.0
    %628 = vmatprep.subr.mxu0 0.0
    %629 = vmatpush1.msra.mxu0 0.0
    %630 = vmatprep.subr.mxu0 0.0
    %631 = vmatpush1.msra.mxu0 0.0
    %632 = vmatprep.mubr.f32.mxu0 0.0
    %633 = vmatmul.mubr.f32.gmra.mrb[0].mxu0 %v456
    %v634 = vpop.f32.mrb[0].mxu0
    %v635 = vadd.f32 %v490, %v634
    %v636 = vpop.f32.mrb[0].mxu0
    %v637 = vadd.f32 %v492, %v636
    %638 = vdwg.mxu0
    %v639 = vadd.f32 %v564, %v109
    %v640 = vadd.f32 %v566, %v113
    %v641 = vadd.f32 %v635, %v117
    %v642 = vadd.f32 %v637, %v121
    %v643 = vxor.u32 %v639, 2147483648
    %v644 = vxor.u32 %v640, 2147483648
    %v645 = vxor.u32 %v641, 2147483648
    %v646 = vmul.f32 %v643, 1.442695
    %v647 = vpow.pop %v646
    %v648 = vmul.f32 %v644, 1.442695
    %v649 = vpow.pop %v648
    %v650 = vmul.f32 %v645, 1.442695
    %v651 = vpow.pop %v650
    %v652 = vadd.f32 %v647, 1.0
    %v653 = vadd.f32 %v649, 1.0
    %v654 = vadd.f32 %v651, 1.0
    %v655 = vrcp.pop %v652
    %v656 = vmul.f32 1.0, %v655
    %v657 = vrcp.pop %v653
    %v658 = vmul.f32 1.0, %v657
    %v659 = vrcp.pop %v654
    %v660 = vmul.f32 1.0, %v659
    %v661 = vtanh.pop %v642
    %v662 = vmul.f32 %v658, %v454
    %v663 = vmul.f32 %v656, %v661
    %v664 = vadd.f32 %v662, %v663
    %v665 = vtanh.pop %v664
    %v666 = vmul.f32 %v660, %v665
    %v667 = vld [vmem:[%s0 + $0x3] sm:$0x1]
    %v668 = vld [vmem:[%s0 + $0xb] sm:$0x1]
    %670 = vset.pattern.permute.xlu0 0
    %671 = vperm.xlu0 %670, %v667
    %v672 = vpop.permute.xlu0 %671
    %675 = vset.pattern.permute.xlu0 0
    %676 = vperm.xlu0 %675, %v668
    %v677 = vpop.permute.xlu0 %676
    %v679 = vmul.f32 %v672, %v145
    %v680 = vmul.f32 %v672, %v149
    %v681 = vmul.f32 %v672, %v153
    %v682 = vmul.f32 %v672, %v157
    %v683 = vmul.f32 %v677, %v145
    %v684 = vmul.f32 %v677, %v149
    %v685 = vmul.f32 %v677, %v153
    %v686 = vmul.f32 %v677, %v157
    %v695 = vrot.slane %v683, 7
    %v696 = vsel %vm237, %v695, %v679
    %v697 = vrot.slane %v684, 7
    %v698 = vsel %vm237, %v697, %v680
    %v699 = vrot.slane %v685, 7
    %v700 = vsel %vm237, %v699, %v681
    %v701 = vrot.slane %v686, 7
    %v702 = vsel %vm237, %v701, %v682
    %707 = vmatprep.subr.mxu0 %v40
    %708 = vmatpush1.msra.mxu0 %v39
    %709 = vmatprep.subr.mxu0 %v44
    %710 = vmatpush1.msra.mxu0 %v43
    %711 = vmatprep.subr.mxu0 %v48
    %712 = vmatpush1.msra.mxu0 %v47
    %713 = vmatprep.subr.mxu0 %v52
    %714 = vmatpush1.msra.mxu0 %v51
    %715 = vmatprep.subr.mxu0 %v56
    %716 = vmatpush1.msra.mxu0 %v55
    %717 = vmatprep.subr.mxu0 %v60
    %718 = vmatpush1.msra.mxu0 %v59
    %719 = vmatprep.subr.mxu0 %v64
    %720 = vmatpush1.msra.mxu0 %v63
    %721 = vmatprep.subr.mxu0 %v68
    %722 = vmatpush1.msra.mxu0 %v67
    %723 = vmatprep.subr.mxu0 %v72
    %724 = vmatpush1.msra.mxu0 %v71
    %725 = vmatprep.subr.mxu0 %v76
    %726 = vmatpush1.msra.mxu0 %v75
    %727 = vmatprep.subr.mxu0 %v80
    %728 = vmatpush1.msra.mxu0 %v79
    %729 = vmatprep.subr.mxu0 %v84
    %730 = vmatpush1.msra.mxu0 %v83
    %731 = vmatprep.subr.mxu0 %v88
    %732 = vmatpush1.msra.mxu0 %v87
    %733 = vmatprep.subr.mxu0 %v92
    %734 = vmatpush1.msra.mxu0 %v91
    %735 = vmatprep.subr.mxu0 %v96
    %736 = vmatpush1.msra.mxu0 %v95
    %737 = vmatprep.subr.mxu0 %v100
    %738 = vmatpush1.msra.mxu0 %v99
    %739 = vmatprep.subr.mxu0 0.0
    %740 = vmatpush1.msra.mxu0 0.0
    %741 = vmatprep.subr.mxu0 0.0
    %742 = vmatpush1.msra.mxu0 0.0
    %743 = vmatprep.subr.mxu0 0.0
    %744 = vmatpush1.msra.mxu0 0.0
    %745 = vmatprep.subr.mxu0 0.0
    %746 = vmatpush1.msra.mxu0 0.0
    %747 = vmatprep.subr.mxu0 0.0
    %748 = vmatpush1.msra.mxu0 0.0
    %749 = vmatprep.subr.mxu0 0.0
    %750 = vmatpush1.msra.mxu0 0.0
    %751 = vmatprep.subr.mxu0 0.0
    %752 = vmatpush1.msra.mxu0 0.0
    %753 = vmatprep.subr.mxu0 0.0
    %754 = vmatpush1.msra.mxu0 0.0
    %755 = vmatprep.subr.mxu0 0.0
    %756 = vmatpush1.msra.mxu0 0.0
    %757 = vmatprep.subr.mxu0 0.0
    %758 = vmatpush1.msra.mxu0 0.0
    %759 = vmatprep.subr.mxu0 0.0
    %760 = vmatpush1.msra.mxu0 0.0
    %761 = vmatprep.subr.mxu0 0.0
    %762 = vmatpush1.msra.mxu0 0.0
    %763 = vmatprep.subr.mxu0 0.0
    %764 = vmatpush1.msra.mxu0 0.0
    %765 = vmatprep.subr.mxu0 0.0
    %766 = vmatpush1.msra.mxu0 0.0
    %767 = vmatprep.subr.mxu0 0.0
    %768 = vmatpush1.msra.mxu0 0.0
    %769 = vmatprep.subr.mxu0 0.0
    %770 = vmatpush1.msra.mxu0 0.0
    %771 = vmatprep.mubr.f32.mxu0 0.0
    %772 = vmatmul.mubr.f32.gmra.mrb[0].mxu0 %v666
    %v773 = vpop.f32.mrb[0].mxu0
    %v774 = vadd.f32 %v696, %v773
    %v775 = vpop.f32.mrb[0].mxu0
    %v776 = vadd.f32 %v698, %v775
    %777 = vdwg.mxu0
    %778 = vmatprep.subr.mxu0 %v42
    %779 = vmatpush1.msra.mxu0 %v41
    %780 = vmatprep.subr.mxu0 %v46
    %781 = vmatpush1.msra.mxu0 %v45
    %782 = vmatprep.subr.mxu0 %v50
    %783 = vmatpush1.msra.mxu0 %v49
    %784 = vmatprep.subr.mxu0 %v54
    %785 = vmatpush1.msra.mxu0 %v53
    %786 = vmatprep.subr.mxu0 %v58
    %787 = vmatpush1.msra.mxu0 %v57
    %788 = vmatprep.subr.mxu0 %v62
    %789 = vmatpush1.msra.mxu0 %v61
    %790 = vmatprep.subr.mxu0 %v66
    %791 = vmatpush1.msra.mxu0 %v65
    %792 = vmatprep.subr.mxu0 %v70
    %793 = vmatpush1.msra.mxu0 %v69
    %794 = vmatprep.subr.mxu0 %v74
    %795 = vmatpush1.msra.mxu0 %v73
    %796 = vmatprep.subr.mxu0 %v78
    %797 = vmatpush1.msra.mxu0 %v77
    %798 = vmatprep.subr.mxu0 %v82
    %799 = vmatpush1.msra.mxu0 %v81
    %800 = vmatprep.subr.mxu0 %v86
    %801 = vmatpush1.msra.mxu0 %v85
    %802 = vmatprep.subr.mxu0 %v90
    %803 = vmatpush1.msra.mxu0 %v89
    %804 = vmatprep.subr.mxu0 %v94
    %805 = vmatpush1.msra.mxu0 %v93
    %806 = vmatprep.subr.mxu0 %v98
    %807 = vmatpush1.msra.mxu0 %v97
    %808 = vmatprep.subr.mxu0 %v102
    %809 = vmatpush1.msra.mxu0 %v101
    %810 = vmatprep.subr.mxu0 0.0
    %811 = vmatpush1.msra.mxu0 0.0
    %812 = vmatprep.subr.mxu0 0.0
    %813 = vmatpush1.msra.mxu0 0.0
    %814 = vmatprep.subr.mxu0 0.0
    %815 = vmatpush1.msra.mxu0 0.0
    %816 = vmatprep.subr.mxu0 0.0
    %817 = vmatpush1.msra.mxu0 0.0
    %818 = vmatprep.subr.mxu0 0.0
    %819 = vmatpush1.msra.mxu0 0.0
    %820 = vmatprep.subr.mxu0 0.0
    %821 = vmatpush1.msra.mxu0 0.0
    %822 = vmatprep.subr.mxu0 0.0
    %823 = vmatpush1.msra.mxu0 0.0
    %824 = vmatprep.subr.mxu0 0.0
    %825 = vmatpush1.msra.mxu0 0.0
    %826 = vmatprep.subr.mxu0 0.0
    %827 = vmatpush1.msra.mxu0 0.0
    %828 = vmatprep.subr.mxu0 0.0
    %829 = vmatpush1.msra.mxu0 0.0
    %830 = vmatprep.subr.mxu0 0.0
    %831 = vmatpush1.msra.mxu0 0.0
    %832 = vmatprep.subr.mxu0 0.0
    %833 = vmatpush1.msra.mxu0 0.0
    %834 = vmatprep.subr.mxu0 0.0
    %835 = vmatpush1.msra.mxu0 0.0
    %836 = vmatprep.subr.mxu0 0.0
    %837 = vmatpush1.msra.mxu0 0.0
    %838 = vmatprep.subr.mxu0 0.0
    %839 = vmatpush1.msra.mxu0 0.0
    %840 = vmatprep.subr.mxu0 0.0
    %841 = vmatpush1.msra.mxu0 0.0
    %842 = vmatprep.mubr.f32.mxu0 0.0
    %843 = vmatmul.mubr.f32.gmra.mrb[0].mxu0 %v666
    %v844 = vpop.f32.mrb[0].mxu0
    %v845 = vadd.f32 %v700, %v844
    %v846 = vpop.f32.mrb[0].mxu0
    %v847 = vadd.f32 %v702, %v846
    %848 = vdwg.mxu0
    %v849 = vadd.f32 %v774, %v109
    %v850 = vadd.f32 %v776, %v113
    %v851 = vadd.f32 %v845, %v117
    %v852 = vadd.f32 %v847, %v121
    %v853 = vxor.u32 %v849, 2147483648
    %v854 = vxor.u32 %v850, 2147483648
    %v855 = vxor.u32 %v851, 2147483648
    %v856 = vmul.f32 %v853, 1.442695
    %v857 = vpow.pop %v856
    %v858 = vmul.f32 %v854, 1.442695
    %v859 = vpow.pop %v858
    %v860 = vmul.f32 %v855, 1.442695
    %v861 = vpow.pop %v860
    %v862 = vadd.f32 %v857, 1.0
    %v863 = vadd.f32 %v859, 1.0
    %v864 = vadd.f32 %v861, 1.0
    %v865 = vrcp.pop %v862
    %v866 = vmul.f32 1.0, %v865
    %v867 = vrcp.pop %v863
    %v868 = vmul.f32 1.0, %v867
    %v869 = vrcp.pop %v864
    %v870 = vmul.f32 1.0, %v869
    %v871 = vtanh.pop %v852
    %v872 = vmul.f32 %v868, %v664
    %v873 = vmul.f32 %v866, %v871
    %v874 = vadd.f32 %v872, %v873
    %v875 = vtanh.pop %v874
    %v876 = vmul.f32 %v870, %v875
    %v877 = vld [vmem:[%s0 + $0x4] sm:$0x1]
    %v878 = vld [vmem:[%s0 + $0xc] sm:$0x1]
    %880 = vset.pattern.permute.xlu0 0
    %881 = vperm.xlu0 %880, %v877
    %v882 = vpop.permute.xlu0 %881
    %885 = vset.pattern.permute.xlu0 0
    %886 = vperm.xlu0 %885, %v878
    %v887 = vpop.permute.xlu0 %886
    %v889 = vmul.f32 %v882, %v145
    %v890 = vmul.f32 %v882, %v149
    %v891 = vmul.f32 %v882, %v153
    %v892 = vmul.f32 %v882, %v157
    %v893 = vmul.f32 %v887, %v145
    %v894 = vmul.f32 %v887, %v149
    %v895 = vmul.f32 %v887, %v153
    %v896 = vmul.f32 %v887, %v157
    %v905 = vrot.slane %v893, 7
    %v906 = vsel %vm237, %v905, %v889
    %v907 = vrot.slane %v894, 7
    %v908 = vsel %vm237, %v907, %v890
    %v909 = vrot.slane %v895, 7
    %v910 = vsel %vm237, %v909, %v891
    %v911 = vrot.slane %v896, 7
    %v912 = vsel %vm237, %v911, %v892
    %917 = vmatprep.subr.mxu0 %v40
    %918 = vmatpush1.msra.mxu0 %v39
    %919 = vmatprep.subr.mxu0 %v44
    %920 = vmatpush1.msra.mxu0 %v43
    %921 = vmatprep.subr.mxu0 %v48
    %922 = vmatpush1.msra.mxu0 %v47
    %923 = vmatprep.subr.mxu0 %v52
    %924 = vmatpush1.msra.mxu0 %v51
    %925 = vmatprep.subr.mxu0 %v56
    %926 = vmatpush1.msra.mxu0 %v55
    %927 = vmatprep.subr.mxu0 %v60
    %928 = vmatpush1.msra.mxu0 %v59
    %929 = vmatprep.subr.mxu0 %v64
    %930 = vmatpush1.msra.mxu0 %v63
    %931 = vmatprep.subr.mxu0 %v68
    %932 = vmatpush1.msra.mxu0 %v67
    %933 = vmatprep.subr.mxu0 %v72
    %934 = vmatpush1.msra.mxu0 %v71
    %935 = vmatprep.subr.mxu0 %v76
    %936 = vmatpush1.msra.mxu0 %v75
    %937 = vmatprep.subr.mxu0 %v80
    %938 = vmatpush1.msra.mxu0 %v79
    %939 = vmatprep.subr.mxu0 %v84
    %940 = vmatpush1.msra.mxu0 %v83
    %941 = vmatprep.subr.mxu0 %v88
    %942 = vmatpush1.msra.mxu0 %v87
    %943 = vmatprep.subr.mxu0 %v92
    %944 = vmatpush1.msra.mxu0 %v91
    %945 = vmatprep.subr.mxu0 %v96
    %946 = vmatpush1.msra.mxu0 %v95
    %947 = vmatprep.subr.mxu0 %v100
    %948 = vmatpush1.msra.mxu0 %v99
    %949 = vmatprep.subr.mxu0 0.0
    %950 = vmatpush1.msra.mxu0 0.0
    %951 = vmatprep.subr.mxu0 0.0
    %952 = vmatpush1.msra.mxu0 0.0
    %953 = vmatprep.subr.mxu0 0.0
    %954 = vmatpush1.msra.mxu0 0.0
    %955 = vmatprep.subr.mxu0 0.0
    %956 = vmatpush1.msra.mxu0 0.0
    %957 = vmatprep.subr.mxu0 0.0
    %958 = vmatpush1.msra.mxu0 0.0
    %959 = vmatprep.subr.mxu0 0.0
    %960 = vmatpush1.msra.mxu0 0.0
    %961 = vmatprep.subr.mxu0 0.0
    %962 = vmatpush1.msra.mxu0 0.0
    %963 = vmatprep.subr.mxu0 0.0
    %964 = vmatpush1.msra.mxu0 0.0
    %965 = vmatprep.subr.mxu0 0.0
    %966 = vmatpush1.msra.mxu0 0.0
    %967 = vmatprep.subr.mxu0 0.0
    %968 = vmatpush1.msra.mxu0 0.0
    %969 = vmatprep.subr.mxu0 0.0
    %970 = vmatpush1.msra.mxu0 0.0
    %971 = vmatprep.subr.mxu0 0.0
    %972 = vmatpush1.msra.mxu0 0.0
    %973 = vmatprep.subr.mxu0 0.0
    %974 = vmatpush1.msra.mxu0 0.0
    %975 = vmatprep.subr.mxu0 0.0
    %976 = vmatpush1.msra.mxu0 0.0
    %977 = vmatprep.subr.mxu0 0.0
    %978 = vmatpush1.msra.mxu0 0.0
    %979 = vmatprep.subr.mxu0 0.0
    %980 = vmatpush1.msra.mxu0 0.0
    %981 = vmatprep.mubr.f32.mxu0 0.0
    %982 = vmatmul.mubr.f32.gmra.mrb[0].mxu0 %v876
    %v983 = vpop.f32.mrb[0].mxu0
    %v984 = vadd.f32 %v906, %v983
    %v985 = vpop.f32.mrb[0].mxu0
    %v986 = vadd.f32 %v908, %v985
    %987 = vdwg.mxu0
    %988 = vmatprep.subr.mxu0 %v42
    %989 = vmatpush1.msra.mxu0 %v41
    %990 = vmatprep.subr.mxu0 %v46
    %991 = vmatpush1.msra.mxu0 %v45
    %992 = vmatprep.subr.mxu0 %v50
    %993 = vmatpush1.msra.mxu0 %v49
    %994 = vmatprep.subr.mxu0 %v54
    %995 = vmatpush1.msra.mxu0 %v53
    %996 = vmatprep.subr.mxu0 %v58
    %997 = vmatpush1.msra.mxu0 %v57
    %998 = vmatprep.subr.mxu0 %v62
    %999 = vmatpush1.msra.mxu0 %v61
    %1000 = vmatprep.subr.mxu0 %v66
    %1001 = vmatpush1.msra.mxu0 %v65
    %1002 = vmatprep.subr.mxu0 %v70
    %1003 = vmatpush1.msra.mxu0 %v69
    %1004 = vmatprep.subr.mxu0 %v74
    %1005 = vmatpush1.msra.mxu0 %v73
    %1006 = vmatprep.subr.mxu0 %v78
    %1007 = vmatpush1.msra.mxu0 %v77
    %1008 = vmatprep.subr.mxu0 %v82
    %1009 = vmatpush1.msra.mxu0 %v81
    %1010 = vmatprep.subr.mxu0 %v86
    %1011 = vmatpush1.msra.mxu0 %v85
    %1012 = vmatprep.subr.mxu0 %v90
    %1013 = vmatpush1.msra.mxu0 %v89
    %1014 = vmatprep.subr.mxu0 %v94
    %1015 = vmatpush1.msra.mxu0 %v93
    %1016 = vmatprep.subr.mxu0 %v98
    %1017 = vmatpush1.msra.mxu0 %v97
    %1018 = vmatprep.subr.mxu0 %v102
    %1019 = vmatpush1.msra.mxu0 %v101
    %1020 = vmatprep.subr.mxu0 0.0
    %1021 = vmatpush1.msra.mxu0 0.0
    %1022 = vmatprep.subr.mxu0 0.0
    %1023 = vmatpush1.msra.mxu0 0.0
    %1024 = vmatprep.subr.mxu0 0.0
    %1025 = vmatpush1.msra.mxu0 0.0
    %1026 = vmatprep.subr.mxu0 0.0
    %1027 = vmatpush1.msra.mxu0 0.0
    %1028 = vmatprep.subr.mxu0 0.0
    %1029 = vmatpush1.msra.mxu0 0.0
    %1030 = vmatprep.subr.mxu0 0.0
    %1031 = vmatpush1.msra.mxu0 0.0
    %1032 = vmatprep.subr.mxu0 0.0
    %1033 = vmatpush1.msra.mxu0 0.0
    %1034 = vmatprep.subr.mxu0 0.0
    %1035 = vmatpush1.msra.mxu0 0.0
    %1036 = vmatprep.subr.mxu0 0.0
    %1037 = vmatpush1.msra.mxu0 0.0
    %1038 = vmatprep.subr.mxu0 0.0
    %1039 = vmatpush1.msra.mxu0 0.0
    %1040 = vmatprep.subr.mxu0 0.0
    %1041 = vmatpush1.msra.mxu0 0.0
    %1042 = vmatprep.subr.mxu0 0.0
    %1043 = vmatpush1.msra.mxu0 0.0
    %1044 = vmatprep.subr.mxu0 0.0
    %1045 = vmatpush1.msra.mxu0 0.0
    %1046 = vmatprep.subr.mxu0 0.0
    %1047 = vmatpush1.msra.mxu0 0.0
    %1048 = vmatprep.subr.mxu0 0.0
    %1049 = vmatpush1.msra.mxu0 0.0
    %1050 = vmatprep.subr.mxu0 0.0
    %1051 = vmatpush1.msra.mxu0 0.0
    %1052 = vmatprep.mubr.f32.mxu0 0.0
    %1053 = vmatmul.mubr.f32.gmra.mrb[0].mxu0 %v876
    %v1054 = vpop.f32.mrb[0].mxu0
    %v1055 = vadd.f32 %v910, %v1054
    %v1056 = vpop.f32.mrb[0].mxu0
    %v1057 = vadd.f32 %v912, %v1056
    %1058 = vdwg.mxu0
    %v1059 = vadd.f32 %v984, %v109
    %v1060 = vadd.f32 %v986, %v113
    %v1061 = vadd.f32 %v1055, %v117
    %v1062 = vadd.f32 %v1057, %v121
    %v1063 = vxor.u32 %v1059, 2147483648
    %v1064 = vxor.u32 %v1060, 2147483648
    %v1065 = vxor.u32 %v1061, 2147483648
    %v1066 = vmul.f32 %v1063, 1.442695
    %v1067 = vpow.pop %v1066
    %v1068 = vmul.f32 %v1064, 1.442695
    %v1069 = vpow.pop %v1068
    %v1070 = vmul.f32 %v1065, 1.442695
    %v1071 = vpow.pop %v1070
    %v1072 = vadd.f32 %v1067, 1.0
    %v1073 = vadd.f32 %v1069, 1.0
    %v1074 = vadd.f32 %v1071, 1.0
    %v1075 = vrcp.pop %v1072
    %v1076 = vmul.f32 1.0, %v1075
    %v1077 = vrcp.pop %v1073
    %v1078 = vmul.f32 1.0, %v1077
    %v1079 = vrcp.pop %v1074
    %v1080 = vmul.f32 1.0, %v1079
    %v1081 = vtanh.pop %v1062
    %v1082 = vmul.f32 %v1078, %v874
    %v1083 = vmul.f32 %v1076, %v1081
    %v1084 = vadd.f32 %v1082, %v1083
    %v1085 = vtanh.pop %v1084
    %v1086 = vmul.f32 %v1080, %v1085
    %v1087 = vld [vmem:[%s0 + $0x5] sm:$0x1]
    %v1088 = vld [vmem:[%s0 + $0xd] sm:$0x1]
    %1090 = vset.pattern.permute.xlu0 0
    %1091 = vperm.xlu0 %1090, %v1087
    %v1092 = vpop.permute.xlu0 %1091
    %1095 = vset.pattern.permute.xlu0 0
    %1096 = vperm.xlu0 %1095, %v1088
    %v1097 = vpop.permute.xlu0 %1096
    %v1099 = vmul.f32 %v1092, %v145
    %v1100 = vmul.f32 %v1092, %v149
    %v1101 = vmul.f32 %v1092, %v153
    %v1102 = vmul.f32 %v1092, %v157
    %v1103 = vmul.f32 %v1097, %v145
    %v1104 = vmul.f32 %v1097, %v149
    %v1105 = vmul.f32 %v1097, %v153
    %v1106 = vmul.f32 %v1097, %v157
    %v1115 = vrot.slane %v1103, 7
    %v1116 = vsel %vm237, %v1115, %v1099
    %v1117 = vrot.slane %v1104, 7
    %v1118 = vsel %vm237, %v1117, %v1100
    %v1119 = vrot.slane %v1105, 7
    %v1120 = vsel %vm237, %v1119, %v1101
    %v1121 = vrot.slane %v1106, 7
    %v1122 = vsel %vm237, %v1121, %v1102
    %1127 = vmatprep.subr.mxu0 %v40
    %1128 = vmatpush1.msra.mxu0 %v39
    %1129 = vmatprep.subr.mxu0 %v44
    %1130 = vmatpush1.msra.mxu0 %v43
    %1131 = vmatprep.subr.mxu0 %v48
    %1132 = vmatpush1.msra.mxu0 %v47
    %1133 = vmatprep.subr.mxu0 %v52
    %1134 = vmatpush1.msra.mxu0 %v51
    %1135 = vmatprep.subr.mxu0 %v56
    %1136 = vmatpush1.msra.mxu0 %v55
    %1137 = vmatprep.subr.mxu0 %v60
    %1138 = vmatpush1.msra.mxu0 %v59
    %1139 = vmatprep.subr.mxu0 %v64
    %1140 = vmatpush1.msra.mxu0 %v63
    %1141 = vmatprep.subr.mxu0 %v68
    %1142 = vmatpush1.msra.mxu0 %v67
    %1143 = vmatprep.subr.mxu0 %v72
    %1144 = vmatpush1.msra.mxu0 %v71
    %1145 = vmatprep.subr.mxu0 %v76
    %1146 = vmatpush1.msra.mxu0 %v75
    %1147 = vmatprep.subr.mxu0 %v80
    %1148 = vmatpush1.msra.mxu0 %v79
    %1149 = vmatprep.subr.mxu0 %v84
    %1150 = vmatpush1.msra.mxu0 %v83
    %1151 = vmatprep.subr.mxu0 %v88
    %1152 = vmatpush1.msra.mxu0 %v87
    %1153 = vmatprep.subr.mxu0 %v92
    %1154 = vmatpush1.msra.mxu0 %v91
    %1155 = vmatprep.subr.mxu0 %v96
    %1156 = vmatpush1.msra.mxu0 %v95
    %1157 = vmatprep.subr.mxu0 %v100
    %1158 = vmatpush1.msra.mxu0 %v99
    %1159 = vmatprep.subr.mxu0 0.0
    %1160 = vmatpush1.msra.mxu0 0.0
    %1161 = vmatprep.subr.mxu0 0.0
    %1162 = vmatpush1.msra.mxu0 0.0
    %1163 = vmatprep.subr.mxu0 0.0
    %1164 = vmatpush1.msra.mxu0 0.0
    %1165 = vmatprep.subr.mxu0 0.0
    %1166 = vmatpush1.msra.mxu0 0.0
    %1167 = vmatprep.subr.mxu0 0.0
    %1168 = vmatpush1.msra.mxu0 0.0
    %1169 = vmatprep.subr.mxu0 0.0
    %1170 = vmatpush1.msra.mxu0 0.0
    %1171 = vmatprep.subr.mxu0 0.0
    %1172 = vmatpush1.msra.mxu0 0.0
    %1173 = vmatprep.subr.mxu0 0.0
    %1174 = vmatpush1.msra.mxu0 0.0
    %1175 = vmatprep.subr.mxu0 0.0
    %1176 = vmatpush1.msra.mxu0 0.0
    %1177 = vmatprep.subr.mxu0 0.0
    %1178 = vmatpush1.msra.mxu0 0.0
    %1179 = vmatprep.subr.mxu0 0.0
    %1180 = vmatpush1.msra.mxu0 0.0
    %1181 = vmatprep.subr.mxu0 0.0
    %1182 = vmatpush1.msra.mxu0 0.0
    %1183 = vmatprep.subr.mxu0 0.0
    %1184 = vmatpush1.msra.mxu0 0.0
    %1185 = vmatprep.subr.mxu0 0.0
    %1186 = vmatpush1.msra.mxu0 0.0
    %1187 = vmatprep.subr.mxu0 0.0
    %1188 = vmatpush1.msra.mxu0 0.0
    %1189 = vmatprep.subr.mxu0 0.0
    %1190 = vmatpush1.msra.mxu0 0.0
    %1191 = vmatprep.mubr.f32.mxu0 0.0
    %1192 = vmatmul.mubr.f32.gmra.mrb[0].mxu0 %v1086
    %v1193 = vpop.f32.mrb[0].mxu0
    %v1194 = vadd.f32 %v1116, %v1193
    %v1195 = vpop.f32.mrb[0].mxu0
    %v1196 = vadd.f32 %v1118, %v1195
    %1197 = vdwg.mxu0
    %1198 = vmatprep.subr.mxu0 %v42
    %1199 = vmatpush1.msra.mxu0 %v41
    %1200 = vmatprep.subr.mxu0 %v46
    %1201 = vmatpush1.msra.mxu0 %v45
    %1202 = vmatprep.subr.mxu0 %v50
    %1203 = vmatpush1.msra.mxu0 %v49
    %1204 = vmatprep.subr.mxu0 %v54
    %1205 = vmatpush1.msra.mxu0 %v53
    %1206 = vmatprep.subr.mxu0 %v58
    %1207 = vmatpush1.msra.mxu0 %v57
    %1208 = vmatprep.subr.mxu0 %v62
    %1209 = vmatpush1.msra.mxu0 %v61
    %1210 = vmatprep.subr.mxu0 %v66
    %1211 = vmatpush1.msra.mxu0 %v65
    %1212 = vmatprep.subr.mxu0 %v70
    %1213 = vmatpush1.msra.mxu0 %v69
    %1214 = vmatprep.subr.mxu0 %v74
    %1215 = vmatpush1.msra.mxu0 %v73
    %1216 = vmatprep.subr.mxu0 %v78
    %1217 = vmatpush1.msra.mxu0 %v77
    %1218 = vmatprep.subr.mxu0 %v82
    %1219 = vmatpush1.msra.mxu0 %v81
    %1220 = vmatprep.subr.mxu0 %v86
    %1221 = vmatpush1.msra.mxu0 %v85
    %1222 = vmatprep.subr.mxu0 %v90
    %1223 = vmatpush1.msra.mxu0 %v89
    %1224 = vmatprep.subr.mxu0 %v94
    %1225 = vmatpush1.msra.mxu0 %v93
    %1226 = vmatprep.subr.mxu0 %v98
    %1227 = vmatpush1.msra.mxu0 %v97
    %1228 = vmatprep.subr.mxu0 %v102
    %1229 = vmatpush1.msra.mxu0 %v101
    %1230 = vmatprep.subr.mxu0 0.0
    %1231 = vmatpush1.msra.mxu0 0.0
    %1232 = vmatprep.subr.mxu0 0.0
    %1233 = vmatpush1.msra.mxu0 0.0
    %1234 = vmatprep.subr.mxu0 0.0
    %1235 = vmatpush1.msra.mxu0 0.0
    %1236 = vmatprep.subr.mxu0 0.0
    %1237 = vmatpush1.msra.mxu0 0.0
    %1238 = vmatprep.subr.mxu0 0.0
    %1239 = vmatpush1.msra.mxu0 0.0
    %1240 = vmatprep.subr.mxu0 0.0
    %1241 = vmatpush1.msra.mxu0 0.0
    %1242 = vmatprep.subr.mxu0 0.0
    %1243 = vmatpush1.msra.mxu0 0.0
    %1244 = vmatprep.subr.mxu0 0.0
    %1245 = vmatpush1.msra.mxu0 0.0
    %1246 = vmatprep.subr.mxu0 0.0
    %1247 = vmatpush1.msra.mxu0 0.0
    %1248 = vmatprep.subr.mxu0 0.0
    %1249 = vmatpush1.msra.mxu0 0.0
    %1250 = vmatprep.subr.mxu0 0.0
    %1251 = vmatpush1.msra.mxu0 0.0
    %1252 = vmatprep.subr.mxu0 0.0
    %1253 = vmatpush1.msra.mxu0 0.0
    %1254 = vmatprep.subr.mxu0 0.0
    %1255 = vmatpush1.msra.mxu0 0.0
    %1256 = vmatprep.subr.mxu0 0.0
    %1257 = vmatpush1.msra.mxu0 0.0
    %1258 = vmatprep.subr.mxu0 0.0
    %1259 = vmatpush1.msra.mxu0 0.0
    %1260 = vmatprep.subr.mxu0 0.0
    %1261 = vmatpush1.msra.mxu0 0.0
    %1262 = vmatprep.mubr.f32.mxu0 0.0
    %1263 = vmatmul.mubr.f32.gmra.mrb[0].mxu0 %v1086
    %v1264 = vpop.f32.mrb[0].mxu0
    %v1265 = vadd.f32 %v1120, %v1264
    %v1266 = vpop.f32.mrb[0].mxu0
    %v1267 = vadd.f32 %v1122, %v1266
    %1268 = vdwg.mxu0
    %v1269 = vadd.f32 %v1194, %v109
    %v1270 = vadd.f32 %v1196, %v113
    %v1271 = vadd.f32 %v1265, %v117
    %v1272 = vadd.f32 %v1267, %v121
    %v1273 = vxor.u32 %v1269, 2147483648
    %v1274 = vxor.u32 %v1270, 2147483648
    %v1275 = vxor.u32 %v1271, 2147483648
    %v1276 = vmul.f32 %v1273, 1.442695
    %v1277 = vpow.pop %v1276
    %v1278 = vmul.f32 %v1274, 1.442695
    %v1279 = vpow.pop %v1278
    %v1280 = vmul.f32 %v1275, 1.442695
    %v1281 = vpow.pop %v1280
    %v1282 = vadd.f32 %v1277, 1.0
    %v1283 = vadd.f32 %v1279, 1.0
    %v1284 = vadd.f32 %v1281, 1.0
    %v1285 = vrcp.pop %v1282
    %v1286 = vmul.f32 1.0, %v1285
    %v1287 = vrcp.pop %v1283
    %v1288 = vmul.f32 1.0, %v1287
    %v1289 = vrcp.pop %v1284
    %v1290 = vmul.f32 1.0, %v1289
    %v1291 = vtanh.pop %v1272
    %v1292 = vmul.f32 %v1288, %v1084
    %v1293 = vmul.f32 %v1286, %v1291
    %v1294 = vadd.f32 %v1292, %v1293
    %v1295 = vtanh.pop %v1294
    %v1296 = vmul.f32 %v1290, %v1295
    %v1297 = vld [vmem:[%s0 + $0x6] sm:$0x1]
    %v1298 = vld [vmem:[%s0 + $0xe] sm:$0x1]
    %1300 = vset.pattern.permute.xlu0 0
    %1301 = vperm.xlu0 %1300, %v1297
    %v1302 = vpop.permute.xlu0 %1301
    %1305 = vset.pattern.permute.xlu0 0
    %1306 = vperm.xlu0 %1305, %v1298
    %v1307 = vpop.permute.xlu0 %1306
    %v1309 = vmul.f32 %v1302, %v145
    %v1310 = vmul.f32 %v1302, %v149
    %v1311 = vmul.f32 %v1302, %v153
    %v1312 = vmul.f32 %v1302, %v157
    %v1313 = vmul.f32 %v1307, %v145
    %v1314 = vmul.f32 %v1307, %v149
    %v1315 = vmul.f32 %v1307, %v153
    %v1316 = vmul.f32 %v1307, %v157
    %v1325 = vrot.slane %v1313, 7
    %v1326 = vsel %vm237, %v1325, %v1309
    %v1327 = vrot.slane %v1314, 7
    %v1328 = vsel %vm237, %v1327, %v1310
    %v1329 = vrot.slane %v1315, 7
    %v1330 = vsel %vm237, %v1329, %v1311
    %v1331 = vrot.slane %v1316, 7
    %v1332 = vsel %vm237, %v1331, %v1312
    %1337 = vmatprep.subr.mxu0 %v40
    %1338 = vmatpush1.msra.mxu0 %v39
    %1339 = vmatprep.subr.mxu0 %v44
    %1340 = vmatpush1.msra.mxu0 %v43
    %1341 = vmatprep.subr.mxu0 %v48
    %1342 = vmatpush1.msra.mxu0 %v47
    %1343 = vmatprep.subr.mxu0 %v52
    %1344 = vmatpush1.msra.mxu0 %v51
    %1345 = vmatprep.subr.mxu0 %v56
    %1346 = vmatpush1.msra.mxu0 %v55
    %1347 = vmatprep.subr.mxu0 %v60
    %1348 = vmatpush1.msra.mxu0 %v59
    %1349 = vmatprep.subr.mxu0 %v64
    %1350 = vmatpush1.msra.mxu0 %v63
    %1351 = vmatprep.subr.mxu0 %v68
    %1352 = vmatpush1.msra.mxu0 %v67
    %1353 = vmatprep.subr.mxu0 %v72
    %1354 = vmatpush1.msra.mxu0 %v71
    %1355 = vmatprep.subr.mxu0 %v76
    %1356 = vmatpush1.msra.mxu0 %v75
    %1357 = vmatprep.subr.mxu0 %v80
    %1358 = vmatpush1.msra.mxu0 %v79
    %1359 = vmatprep.subr.mxu0 %v84
    %1360 = vmatpush1.msra.mxu0 %v83
    %1361 = vmatprep.subr.mxu0 %v88
    %1362 = vmatpush1.msra.mxu0 %v87
    %1363 = vmatprep.subr.mxu0 %v92
    %1364 = vmatpush1.msra.mxu0 %v91
    %1365 = vmatprep.subr.mxu0 %v96
    %1366 = vmatpush1.msra.mxu0 %v95
    %1367 = vmatprep.subr.mxu0 %v100
    %1368 = vmatpush1.msra.mxu0 %v99
    %1369 = vmatprep.subr.mxu0 0.0
    %1370 = vmatpush1.msra.mxu0 0.0
    %1371 = vmatprep.subr.mxu0 0.0
    %1372 = vmatpush1.msra.mxu0 0.0
    %1373 = vmatprep.subr.mxu0 0.0
    %1374 = vmatpush1.msra.mxu0 0.0
    %1375 = vmatprep.subr.mxu0 0.0
    %1376 = vmatpush1.msra.mxu0 0.0
    %1377 = vmatprep.subr.mxu0 0.0
    %1378 = vmatpush1.msra.mxu0 0.0
    %1379 = vmatprep.subr.mxu0 0.0
    %1380 = vmatpush1.msra.mxu0 0.0
    %1381 = vmatprep.subr.mxu0 0.0
    %1382 = vmatpush1.msra.mxu0 0.0
    %1383 = vmatprep.subr.mxu0 0.0
    %1384 = vmatpush1.msra.mxu0 0.0
    %1385 = vmatprep.subr.mxu0 0.0
    %1386 = vmatpush1.msra.mxu0 0.0
    %1387 = vmatprep.subr.mxu0 0.0
    %1388 = vmatpush1.msra.mxu0 0.0
    %1389 = vmatprep.subr.mxu0 0.0
    %1390 = vmatpush1.msra.mxu0 0.0
    %1391 = vmatprep.subr.mxu0 0.0
    %1392 = vmatpush1.msra.mxu0 0.0
    %1393 = vmatprep.subr.mxu0 0.0
    %1394 = vmatpush1.msra.mxu0 0.0
    %1395 = vmatprep.subr.mxu0 0.0
    %1396 = vmatpush1.msra.mxu0 0.0
    %1397 = vmatprep.subr.mxu0 0.0
    %1398 = vmatpush1.msra.mxu0 0.0
    %1399 = vmatprep.subr.mxu0 0.0
    %1400 = vmatpush1.msra.mxu0 0.0
    %1401 = vmatprep.mubr.f32.mxu0 0.0
    %1402 = vmatmul.mubr.f32.gmra.mrb[0].mxu0 %v1296
    %v1403 = vpop.f32.mrb[0].mxu0
    %v1404 = vadd.f32 %v1326, %v1403
    %v1405 = vpop.f32.mrb[0].mxu0
    %v1406 = vadd.f32 %v1328, %v1405
    %1407 = vdwg.mxu0
    %1408 = vmatprep.subr.mxu0 %v42
    %1409 = vmatpush1.msra.mxu0 %v41
    %1410 = vmatprep.subr.mxu0 %v46
    %1411 = vmatpush1.msra.mxu0 %v45
    %1412 = vmatprep.subr.mxu0 %v50
    %1413 = vmatpush1.msra.mxu0 %v49
    %1414 = vmatprep.subr.mxu0 %v54
    %1415 = vmatpush1.msra.mxu0 %v53
    %1416 = vmatprep.subr.mxu0 %v58
    %1417 = vmatpush1.msra.mxu0 %v57
    %1418 = vmatprep.subr.mxu0 %v62
    %1419 = vmatpush1.msra.mxu0 %v61
    %1420 = vmatprep.subr.mxu0 %v66
    %1421 = vmatpush1.msra.mxu0 %v65
    %1422 = vmatprep.subr.mxu0 %v70
    %1423 = vmatpush1.msra.mxu0 %v69
    %1424 = vmatprep.subr.mxu0 %v74
    %1425 = vmatpush1.msra.mxu0 %v73
    %1426 = vmatprep.subr.mxu0 %v78
    %1427 = vmatpush1.msra.mxu0 %v77
    %1428 = vmatprep.subr.mxu0 %v82
    %1429 = vmatpush1.msra.mxu0 %v81
    %1430 = vmatprep.subr.mxu0 %v86
    %1431 = vmatpush1.msra.mxu0 %v85
    %1432 = vmatprep.subr.mxu0 %v90
    %1433 = vmatpush1.msra.mxu0 %v89
    %1434 = vmatprep.subr.mxu0 %v94
    %1435 = vmatpush1.msra.mxu0 %v93
    %1436 = vmatprep.subr.mxu0 %v98
    %1437 = vmatpush1.msra.mxu0 %v97
    %1438 = vmatprep.subr.mxu0 %v102
    %1439 = vmatpush1.msra.mxu0 %v101
    %1440 = vmatprep.subr.mxu0 0.0
    %1441 = vmatpush1.msra.mxu0 0.0
    %1442 = vmatprep.subr.mxu0 0.0
    %1443 = vmatpush1.msra.mxu0 0.0
    %1444 = vmatprep.subr.mxu0 0.0
    %1445 = vmatpush1.msra.mxu0 0.0
    %1446 = vmatprep.subr.mxu0 0.0
    %1447 = vmatpush1.msra.mxu0 0.0
    %1448 = vmatprep.subr.mxu0 0.0
    %1449 = vmatpush1.msra.mxu0 0.0
    %1450 = vmatprep.subr.mxu0 0.0
    %1451 = vmatpush1.msra.mxu0 0.0
    %1452 = vmatprep.subr.mxu0 0.0
    %1453 = vmatpush1.msra.mxu0 0.0
    %1454 = vmatprep.subr.mxu0 0.0
    %1455 = vmatpush1.msra.mxu0 0.0
    %1456 = vmatprep.subr.mxu0 0.0
    %1457 = vmatpush1.msra.mxu0 0.0
    %1458 = vmatprep.subr.mxu0 0.0
    %1459 = vmatpush1.msra.mxu0 0.0
    %1460 = vmatprep.subr.mxu0 0.0
    %1461 = vmatpush1.msra.mxu0 0.0
    %1462 = vmatprep.subr.mxu0 0.0
    %1463 = vmatpush1.msra.mxu0 0.0
    %1464 = vmatprep.subr.mxu0 0.0
    %1465 = vmatpush1.msra.mxu0 0.0
    %1466 = vmatprep.subr.mxu0 0.0
    %1467 = vmatpush1.msra.mxu0 0.0
    %1468 = vmatprep.subr.mxu0 0.0
    %1469 = vmatpush1.msra.mxu0 0.0
    %1470 = vmatprep.subr.mxu0 0.0
    %1471 = vmatpush1.msra.mxu0 0.0
    %1472 = vmatprep.mubr.f32.mxu0 0.0
    %1473 = vmatmul.mubr.f32.gmra.mrb[0].mxu0 %v1296
    %v1474 = vpop.f32.mrb[0].mxu0
    %v1475 = vadd.f32 %v1330, %v1474
    %v1476 = vpop.f32.mrb[0].mxu0
    %v1477 = vadd.f32 %v1332, %v1476
    %1478 = vdwg.mxu0
    %v1479 = vadd.f32 %v1404, %v109
    %v1480 = vadd.f32 %v1406, %v113
    %v1481 = vadd.f32 %v1475, %v117
    %v1482 = vadd.f32 %v1477, %v121
    %v1483 = vxor.u32 %v1479, 2147483648
    %v1484 = vxor.u32 %v1480, 2147483648
    %v1485 = vxor.u32 %v1481, 2147483648
    %v1486 = vmul.f32 %v1483, 1.442695
    %v1487 = vpow.pop %v1486
    %v1488 = vmul.f32 %v1484, 1.442695
    %v1489 = vpow.pop %v1488
    %v1490 = vmul.f32 %v1485, 1.442695
    %v1491 = vpow.pop %v1490
    %v1492 = vadd.f32 %v1487, 1.0
    %v1493 = vadd.f32 %v1489, 1.0
    %v1494 = vadd.f32 %v1491, 1.0
    %v1495 = vrcp.pop %v1492
    %v1496 = vmul.f32 1.0, %v1495
    %v1497 = vrcp.pop %v1493
    %v1498 = vmul.f32 1.0, %v1497
    %v1499 = vrcp.pop %v1494
    %v1500 = vmul.f32 1.0, %v1499
    %v1501 = vtanh.pop %v1482
    %v1502 = vmul.f32 %v1498, %v1294
    %v1503 = vmul.f32 %v1496, %v1501
    %v1504 = vadd.f32 %v1502, %v1503
    %v1505 = vtanh.pop %v1504
    %v1506 = vmul.f32 %v1500, %v1505
    %v1507 = vld [vmem:[%s0 + $0x7] sm:$0x1]
    %v1508 = vld [vmem:[%s0 + $0xf] sm:$0x1]
    %1510 = vset.pattern.permute.xlu0 0
    %1511 = vperm.xlu0 %1510, %v1507
    %v1512 = vpop.permute.xlu0 %1511
    %1515 = vset.pattern.permute.xlu0 0
    %1516 = vperm.xlu0 %1515, %v1508
    %v1517 = vpop.permute.xlu0 %1516
    %v1519 = vmul.f32 %v1512, %v145
    %v1520 = vmul.f32 %v1512, %v149
    %v1521 = vmul.f32 %v1512, %v153
    %v1522 = vmul.f32 %v1512, %v157
    %v1523 = vmul.f32 %v1517, %v145
    %v1524 = vmul.f32 %v1517, %v149
    %v1525 = vmul.f32 %v1517, %v153
    %v1526 = vmul.f32 %v1517, %v157
    %v1535 = vrot.slane %v1523, 7
    %v1536 = vsel %vm237, %v1535, %v1519
    %v1537 = vrot.slane %v1524, 7
    %v1538 = vsel %vm237, %v1537, %v1520
    %v1539 = vrot.slane %v1525, 7
    %v1540 = vsel %vm237, %v1539, %v1521
    %v1541 = vrot.slane %v1526, 7
    %v1542 = vsel %vm237, %v1541, %v1522
    %1547 = vmatprep.subr.mxu0 %v40
    %1548 = vmatpush1.msra.mxu0 %v39
    %1549 = vmatprep.subr.mxu0 %v44
    %1550 = vmatpush1.msra.mxu0 %v43
    %1551 = vmatprep.subr.mxu0 %v48
    %1552 = vmatpush1.msra.mxu0 %v47
    %1553 = vmatprep.subr.mxu0 %v52
    %1554 = vmatpush1.msra.mxu0 %v51
    %1555 = vmatprep.subr.mxu0 %v56
    %1556 = vmatpush1.msra.mxu0 %v55
    %1557 = vmatprep.subr.mxu0 %v60
    %1558 = vmatpush1.msra.mxu0 %v59
    %1559 = vmatprep.subr.mxu0 %v64
    %1560 = vmatpush1.msra.mxu0 %v63
    %1561 = vmatprep.subr.mxu0 %v68
    %1562 = vmatpush1.msra.mxu0 %v67
    %1563 = vmatprep.subr.mxu0 %v72
    %1564 = vmatpush1.msra.mxu0 %v71
    %1565 = vmatprep.subr.mxu0 %v76
    %1566 = vmatpush1.msra.mxu0 %v75
    %1567 = vmatprep.subr.mxu0 %v80
    %1568 = vmatpush1.msra.mxu0 %v79
    %1569 = vmatprep.subr.mxu0 %v84
    %1570 = vmatpush1.msra.mxu0 %v83
    %1571 = vmatprep.subr.mxu0 %v88
    %1572 = vmatpush1.msra.mxu0 %v87
    %1573 = vmatprep.subr.mxu0 %v92
    %1574 = vmatpush1.msra.mxu0 %v91
    %1575 = vmatprep.subr.mxu0 %v96
    %1576 = vmatpush1.msra.mxu0 %v95
    %1577 = vmatprep.subr.mxu0 %v100
    %1578 = vmatpush1.msra.mxu0 %v99
    %1579 = vmatprep.subr.mxu0 0.0
    %1580 = vmatpush1.msra.mxu0 0.0
    %1581 = vmatprep.subr.mxu0 0.0
    %1582 = vmatpush1.msra.mxu0 0.0
    %1583 = vmatprep.subr.mxu0 0.0
    %1584 = vmatpush1.msra.mxu0 0.0
    %1585 = vmatprep.subr.mxu0 0.0
    %1586 = vmatpush1.msra.mxu0 0.0
    %1587 = vmatprep.subr.mxu0 0.0
    %1588 = vmatpush1.msra.mxu0 0.0
    %1589 = vmatprep.subr.mxu0 0.0
    %1590 = vmatpush1.msra.mxu0 0.0
    %1591 = vmatprep.subr.mxu0 0.0
    %1592 = vmatpush1.msra.mxu0 0.0
    %1593 = vmatprep.subr.mxu0 0.0
    %1594 = vmatpush1.msra.mxu0 0.0
    %1595 = vmatprep.subr.mxu0 0.0
    %1596 = vmatpush1.msra.mxu0 0.0
    %1597 = vmatprep.subr.mxu0 0.0
    %1598 = vmatpush1.msra.mxu0 0.0
    %1599 = vmatprep.subr.mxu0 0.0
    %1600 = vmatpush1.msra.mxu0 0.0
    %1601 = vmatprep.subr.mxu0 0.0
    %1602 = vmatpush1.msra.mxu0 0.0
    %1603 = vmatprep.subr.mxu0 0.0
    %1604 = vmatpush1.msra.mxu0 0.0
    %1605 = vmatprep.subr.mxu0 0.0
    %1606 = vmatpush1.msra.mxu0 0.0
    %1607 = vmatprep.subr.mxu0 0.0
    %1608 = vmatpush1.msra.mxu0 0.0
    %1609 = vmatprep.subr.mxu0 0.0
    %1610 = vmatpush1.msra.mxu0 0.0
    %1611 = vmatprep.mubr.f32.mxu0 0.0
    %1612 = vmatmul.mubr.f32.gmra.mrb[0].mxu0 %v1506
    %v1613 = vpop.f32.mrb[0].mxu0
    %v1614 = vadd.f32 %v1536, %v1613
    %v1615 = vpop.f32.mrb[0].mxu0
    %v1616 = vadd.f32 %v1538, %v1615
    %1617 = vdwg.mxu0
    %1618 = vmatprep.subr.mxu0 %v42
    %1619 = vmatpush1.msra.mxu0 %v41
    %1620 = vmatprep.subr.mxu0 %v46
    %1621 = vmatpush1.msra.mxu0 %v45
    %1622 = vmatprep.subr.mxu0 %v50
    %1623 = vmatpush1.msra.mxu0 %v49
    %1624 = vmatprep.subr.mxu0 %v54
    %1625 = vmatpush1.msra.mxu0 %v53
    %1626 = vmatprep.subr.mxu0 %v58
    %1627 = vmatpush1.msra.mxu0 %v57
    %1628 = vmatprep.subr.mxu0 %v62
    %1629 = vmatpush1.msra.mxu0 %v61
    %1630 = vmatprep.subr.mxu0 %v66
    %1631 = vmatpush1.msra.mxu0 %v65
    %1632 = vmatprep.subr.mxu0 %v70
    %1633 = vmatpush1.msra.mxu0 %v69
    %1634 = vmatprep.subr.mxu0 %v74
    %1635 = vmatpush1.msra.mxu0 %v73
    %1636 = vmatprep.subr.mxu0 %v78
    %1637 = vmatpush1.msra.mxu0 %v77
    %1638 = vmatprep.subr.mxu0 %v82
    %1639 = vmatpush1.msra.mxu0 %v81
    %1640 = vmatprep.subr.mxu0 %v86
    %1641 = vmatpush1.msra.mxu0 %v85
    %1642 = vmatprep.subr.mxu0 %v90
    %1643 = vmatpush1.msra.mxu0 %v89
    %1644 = vmatprep.subr.mxu0 %v94
    %1645 = vmatpush1.msra.mxu0 %v93
    %1646 = vmatprep.subr.mxu0 %v98
    %1647 = vmatpush1.msra.mxu0 %v97
    %1648 = vmatprep.subr.mxu0 %v102
    %1649 = vmatpush1.msra.mxu0 %v101
    %1650 = vmatprep.subr.mxu0 0.0
    %1651 = vmatpush1.msra.mxu0 0.0
    %1652 = vmatprep.subr.mxu0 0.0
    %1653 = vmatpush1.msra.mxu0 0.0
    %1654 = vmatprep.subr.mxu0 0.0
    %1655 = vmatpush1.msra.mxu0 0.0
    %1656 = vmatprep.subr.mxu0 0.0
    %1657 = vmatpush1.msra.mxu0 0.0
    %1658 = vmatprep.subr.mxu0 0.0
    %1659 = vmatpush1.msra.mxu0 0.0
    %1660 = vmatprep.subr.mxu0 0.0
    %1661 = vmatpush1.msra.mxu0 0.0
    %1662 = vmatprep.subr.mxu0 0.0
    %1663 = vmatpush1.msra.mxu0 0.0
    %1664 = vmatprep.subr.mxu0 0.0
    %1665 = vmatpush1.msra.mxu0 0.0
    %1666 = vmatprep.subr.mxu0 0.0
    %1667 = vmatpush1.msra.mxu0 0.0
    %1668 = vmatprep.subr.mxu0 0.0
    %1669 = vmatpush1.msra.mxu0 0.0
    %1670 = vmatprep.subr.mxu0 0.0
    %1671 = vmatpush1.msra.mxu0 0.0
    %1672 = vmatprep.subr.mxu0 0.0
    %1673 = vmatpush1.msra.mxu0 0.0
    %1674 = vmatprep.subr.mxu0 0.0
    %1675 = vmatpush1.msra.mxu0 0.0
    %1676 = vmatprep.subr.mxu0 0.0
    %1677 = vmatpush1.msra.mxu0 0.0
    %1678 = vmatprep.subr.mxu0 0.0
    %1679 = vmatpush1.msra.mxu0 0.0
    %1680 = vmatprep.subr.mxu0 0.0
    %1681 = vmatpush1.msra.mxu0 0.0
    %1682 = vmatprep.mubr.f32.mxu0 0.0
    %1683 = vmatmul.mubr.f32.gmra.mrb[0].mxu0 %v1506
    %v1684 = vpop.f32.mrb[0].mxu0
    %v1685 = vadd.f32 %v1540, %v1684
    %v1686 = vpop.f32.mrb[0].mxu0
    %v1687 = vadd.f32 %v1542, %v1686
    %1688 = vdwg.mxu0
    %v1689 = vadd.f32 %v1614, %v109
    %v1690 = vadd.f32 %v1616, %v113
    %v1691 = vadd.f32 %v1685, %v117
    %v1692 = vadd.f32 %v1687, %v121
    %v1693 = vxor.u32 %v1689, 2147483648
    %v1694 = vxor.u32 %v1690, 2147483648
    %v1695 = vxor.u32 %v1691, 2147483648
    %v1696 = vmul.f32 %v1693, 1.442695
    %v1697 = vpow.pop %v1696
    %v1698 = vmul.f32 %v1694, 1.442695
    %v1699 = vpow.pop %v1698
    %v1700 = vmul.f32 %v1695, 1.442695
    %v1701 = vpow.pop %v1700
    %v1702 = vadd.f32 %v1697, 1.0
    %v1703 = vadd.f32 %v1699, 1.0
    %v1704 = vadd.f32 %v1701, 1.0
    %v1705 = vrcp.pop %v1702
    %v1706 = vmul.f32 1.0, %v1705
    %v1707 = vrcp.pop %v1703
    %v1708 = vmul.f32 1.0, %v1707
    %v1709 = vrcp.pop %v1704
    %v1710 = vmul.f32 1.0, %v1709
    %v1711 = vtanh.pop %v1692
    %v1712 = vmul.f32 %v1708, %v1504
    %v1713 = vmul.f32 %v1706, %v1711
    %v1714 = vadd.f32 %v1712, %v1713
    %v1715 = vtanh.pop %v1714
    %v1716 = vmul.f32 %v1710, %v1715
    %1717 = vmatprep.subr.mxu0 %v40
    %1718 = vmatpush1.msra.mxu0 %v39
    %1719 = vmatprep.subr.mxu0 %v44
    %1720 = vmatpush1.msra.mxu0 %v43
    %1721 = vmatprep.subr.mxu0 %v48
    %1722 = vmatpush1.msra.mxu0 %v47
    %1723 = vmatprep.subr.mxu0 %v52
    %1724 = vmatpush1.msra.mxu0 %v51
    %1725 = vmatprep.subr.mxu0 %v56
    %1726 = vmatpush1.msra.mxu0 %v55
    %1727 = vmatprep.subr.mxu0 %v60
    %1728 = vmatpush1.msra.mxu0 %v59
    %1729 = vmatprep.subr.mxu0 %v64
    %1730 = vmatpush1.msra.mxu0 %v63
    %1731 = vmatprep.subr.mxu0 %v68
    %1732 = vmatpush1.msra.mxu0 %v67
    %1733 = vmatprep.subr.mxu0 %v72
    %1734 = vmatpush1.msra.mxu0 %v71
    %1735 = vmatprep.subr.mxu0 %v76
    %1736 = vmatpush1.msra.mxu0 %v75
    %1737 = vmatprep.subr.mxu0 %v80
    %1738 = vmatpush1.msra.mxu0 %v79
    %1739 = vmatprep.subr.mxu0 %v84
    %1740 = vmatpush1.msra.mxu0 %v83
    %1741 = vmatprep.subr.mxu0 %v88
    %1742 = vmatpush1.msra.mxu0 %v87
    %1743 = vmatprep.subr.mxu0 %v92
    %1744 = vmatpush1.msra.mxu0 %v91
    %1745 = vmatprep.subr.mxu0 %v96
    %1746 = vmatpush1.msra.mxu0 %v95
    %1747 = vmatprep.subr.mxu0 %v100
    %1748 = vmatpush1.msra.mxu0 %v99
    %1749 = vmatprep.subr.mxu0 0.0
    %1750 = vmatpush1.msra.mxu0 0.0
    %1751 = vmatprep.subr.mxu0 0.0
    %1752 = vmatpush1.msra.mxu0 0.0
    %1753 = vmatprep.subr.mxu0 0.0
    %1754 = vmatpush1.msra.mxu0 0.0
    %1755 = vmatprep.subr.mxu0 0.0
    %1756 = vmatpush1.msra.mxu0 0.0
    %1757 = vmatprep.subr.mxu0 0.0
    %1758 = vmatpush1.msra.mxu0 0.0
    %1759 = vmatprep.subr.mxu0 0.0
    %1760 = vmatpush1.msra.mxu0 0.0
    %1761 = vmatprep.subr.mxu0 0.0
    %1762 = vmatpush1.msra.mxu0 0.0
    %1763 = vmatprep.subr.mxu0 0.0
    %1764 = vmatpush1.msra.mxu0 0.0
    %1765 = vmatprep.subr.mxu0 0.0
    %1766 = vmatpush1.msra.mxu0 0.0
    %1767 = vmatprep.subr.mxu0 0.0
    %1768 = vmatpush1.msra.mxu0 0.0
    %1769 = vmatprep.subr.mxu0 0.0
    %1770 = vmatpush1.msra.mxu0 0.0
    %1771 = vmatprep.subr.mxu0 0.0
    %1772 = vmatpush1.msra.mxu0 0.0
    %1773 = vmatprep.subr.mxu0 0.0
    %1774 = vmatpush1.msra.mxu0 0.0
    %1775 = vmatprep.subr.mxu0 0.0
    %1776 = vmatpush1.msra.mxu0 0.0
    %1777 = vmatprep.subr.mxu0 0.0
    %1778 = vmatpush1.msra.mxu0 0.0
    %1779 = vmatprep.subr.mxu0 0.0
    %1780 = vmatpush1.msra.mxu0 0.0
    %1781 = vmatprep.mubr.f32.mxu0 0.0
    %1782 = vmatmul.mubr.f32.gmra.mrb[0].mxu0 %v1716
    %v1783 = vpop.f32.mrb[0].mxu0
    %v1784 = vadd.f32 %v109, %v1783
    %v1785 = vpop.f32.mrb[0].mxu0
    %v1786 = vadd.f32 %v113, %v1785
    %1787 = vdwg.mxu0
    %1788 = vmatprep.subr.mxu0 %v42
    %1789 = vmatpush1.msra.mxu0 %v41
    %1790 = vmatprep.subr.mxu0 %v46
    %1791 = vmatpush1.msra.mxu0 %v45
    %1792 = vmatprep.subr.mxu0 %v50
    %1793 = vmatpush1.msra.mxu0 %v49
    %1794 = vmatprep.subr.mxu0 %v54
    %1795 = vmatpush1.msra.mxu0 %v53
    %1796 = vmatprep.subr.mxu0 %v58
    %1797 = vmatpush1.msra.mxu0 %v57
    %1798 = vmatprep.subr.mxu0 %v62
    %1799 = vmatpush1.msra.mxu0 %v61
    %1800 = vmatprep.subr.mxu0 %v66
    %1801 = vmatpush1.msra.mxu0 %v65
    %1802 = vmatprep.subr.mxu0 %v70
    %1803 = vmatpush1.msra.mxu0 %v69
    %1804 = vmatprep.subr.mxu0 %v74
    %1805 = vmatpush1.msra.mxu0 %v73
    %1806 = vmatprep.subr.mxu0 %v78
    %1807 = vmatpush1.msra.mxu0 %v77
    %1808 = vmatprep.subr.mxu0 %v82
    %1809 = vmatpush1.msra.mxu0 %v81
    %1810 = vmatprep.subr.mxu0 %v86
    %1811 = vmatpush1.msra.mxu0 %v85
    %1812 = vmatprep.subr.mxu0 %v90
    %1813 = vmatpush1.msra.mxu0 %v89
    %1814 = vmatprep.subr.mxu0 %v94
    %1815 = vmatpush1.msra.mxu0 %v93
    %1816 = vmatprep.subr.mxu0 %v98
    %1817 = vmatpush1.msra.mxu0 %v97
    %1818 = vmatprep.subr.mxu0 %v102
    %1819 = vmatpush1.msra.mxu0 %v101
    %1820 = vmatprep.subr.mxu0 0.0
    %1821 = vmatpush1.msra.mxu0 0.0
    %1822 = vmatprep.subr.mxu0 0.0
    %1823 = vmatpush1.msra.mxu0 0.0
    %1824 = vmatprep.subr.mxu0 0.0
    %1825 = vmatpush1.msra.mxu0 0.0
    %1826 = vmatprep.subr.mxu0 0.0
    %1827 = vmatpush1.msra.mxu0 0.0
    %1828 = vmatprep.subr.mxu0 0.0
    %1829 = vmatpush1.msra.mxu0 0.0
    %1830 = vmatprep.subr.mxu0 0.0
    %1831 = vmatpush1.msra.mxu0 0.0
    %1832 = vmatprep.subr.mxu0 0.0
    %1833 = vmatpush1.msra.mxu0 0.0
    %1834 = vmatprep.subr.mxu0 0.0
    %1835 = vmatpush1.msra.mxu0 0.0
    %1836 = vmatprep.subr.mxu0 0.0
    %1837 = vmatpush1.msra.mxu0 0.0
    %1838 = vmatprep.subr.mxu0 0.0
    %1839 = vmatpush1.msra.mxu0 0.0
    %1840 = vmatprep.subr.mxu0 0.0
    %1841 = vmatpush1.msra.mxu0 0.0
    %1842 = vmatprep.subr.mxu0 0.0
    %1843 = vmatpush1.msra.mxu0 0.0
    %1844 = vmatprep.subr.mxu0 0.0
    %1845 = vmatpush1.msra.mxu0 0.0
    %1846 = vmatprep.subr.mxu0 0.0
    %1847 = vmatpush1.msra.mxu0 0.0
    %1848 = vmatprep.subr.mxu0 0.0
    %1849 = vmatpush1.msra.mxu0 0.0
    %1850 = vmatprep.subr.mxu0 0.0
    %1851 = vmatpush1.msra.mxu0 0.0
    %1852 = vmatprep.mubr.f32.mxu0 0.0
    %1853 = vmatmul.mubr.f32.gmra.mrb[0].mxu0 %v1716
    %v1854 = vpop.f32.mrb[0].mxu0
    %v1855 = vadd.f32 %v117, %v1854
    %v1856 = vpop.f32.mrb[0].mxu0
    %v1857 = vadd.f32 %v121, %v1856
    %1858 = vdwg.mxu0
    %v1859 = vxor.u32 %v1784, 2147483648
    %v1860 = vxor.u32 %v1786, 2147483648
    %v1861 = vxor.u32 %v1855, 2147483648
    %v1862 = vmul.f32 %v1859, 1.442695
    %v1863 = vpow.pop %v1862
    %v1864 = vmul.f32 %v1860, 1.442695
    %v1865 = vpow.pop %v1864
    %v1866 = vmul.f32 %v1861, 1.442695
    %v1867 = vpow.pop %v1866
    %v1868 = vadd.f32 %v1863, 1.0
    %v1869 = vadd.f32 %v1865, 1.0
    %v1870 = vadd.f32 %v1867, 1.0
    %v1871 = vrcp.pop %v1868
    %v1872 = vmul.f32 1.0, %v1871
    %v1873 = vrcp.pop %v1869
    %v1874 = vmul.f32 1.0, %v1873
    %v1875 = vrcp.pop %v1870
    %v1876 = vmul.f32 1.0, %v1875
    %v1877 = vtanh.pop %v1857
    %v1878 = vmul.f32 %v1874, %v1714
    %v1879 = vmul.f32 %v1872, %v1877
    %v1880 = vadd.f32 %v1878, %v1879
    %v1881 = vtanh.pop %v1880
    %v1882 = vmul.f32 %v1876, %v1881
    %v1883 = vld [vmem:[%s4] sm:$0x1]
    %v1885 = vlaneseq
    %v1886 = vshrl.u32 %v1885, 7
    %v1887 = vsub.s32 0, %v1886
    %v1888 = vrot.slane %v1883, %v1887
    %v1890 = vmul.f32 %v1882, %v1888
    %vm1891 = vcmask 1041408
    %v1892 = vsel %vm1891, %v1890, 0.0
    %1893 = vadd.xlane.f32.xlu0 %v1892
    %v1894 = vpop.xlane.xlu0 %1893
    %v1895 = vld [vmem:[#allocation2] sm:$0x1]
    %v1897 = vlaneseq
    %v1898 = vshrl.u32 %v1897, 7
    %v1899 = vsub.s32 0, %v1898
    %v1900 = vrot.slane %v1895, %v1899
    %v1902 = vadd.f32 %v1894, %v1900
    %vm1903 = vcmask 1024
    %1904 = vst.msk [vmem:[%s6] sm:$0x3] %vm1903, %v1902
    // Predicated region
    $region30: #{lstm_forward.1} parent=1 // pred_check
      _
    $region31: #{lstm_forward.1} parent=1 // pred_check_branch
      %1906 = sbr.rel (0) target = $region33
    $region32: #{lstm_forward.1} parent=1 // pred_region
      _
    $region33: #{lstm_forward.1} parent=1 // pred_fallthru
      _
    // Predicated region
    $region34: #{lstm_forward.1} parent=1 // pred_check
      _
    $region35: #{lstm_forward.1} parent=1 // pred_check_branch
      %1908 = sbr.rel (0) target = $region37
    $region36: #{lstm_forward.1} parent=1 // pred_region
      _
    $region37: #{lstm_forward.1} parent=1 // pred_fallthru
      _
    %1909 = vsyncpa [#allocation4], 1

</llo_original>
